<compile_context>
chip_gen: v7x
topology: tpu7x:2x2x1
jax: 0.10.0
libtpu: 0.0.40
codegen_flags: <defaults>
</compile_context>

<pallas_src>
import functools

import jax
import jax.numpy as jnp
import numpy as np
from jax.experimental import pallas as pl
from jax.experimental.pallas import tpu as pltpu

# ----------------------------------------------------------------------------
# Constants
# ----------------------------------------------------------------------------
LANES = 128                                   # lane-dense channel padding
C_STEM, C_EXP, C_SE, C_PROJ, C_HEAD = 16, 64, 16, 24, 64
STEM_K = 16                                   # 2x2 space-to-depth * 3 channels = 12, pad to 16

# indices into the packed weight stack / bias stack
W_EXP, W_SE1, W_SE2, W_PROJ, W_HEAD, W_CLS = range(6)
B_STEM, B_EXP, B_DW, B_SE1, B_SE2, B_PROJ, B_HEAD, B_CLS = range(8)


def _sigmoid(x):
    # 1/(1+exp(-x)) with the reciprocal on the EUP slot (feedback: avoid VALU divide).
    return pl.reciprocal(1.0 + jnp.exp(-x), approx=True)


def _silu(x):
    return x * _sigmoid(x)


# ----------------------------------------------------------------------------
# Fused Pallas kernel: one grid step == one image, whole network forward
# ----------------------------------------------------------------------------
def _effnet_fused_kernel(x_ref, stem_w_ref, dw_w_ref, w_ref, b_ref, o_ref, epad_ref,
                         *, ho, wo):
    f32, bf16 = jnp.float32, jnp.bfloat16
    m = ho * wo

    def mxu(a, k):
        # bf16 operands, f32 accumulation on the MXU.
        return jnp.dot(a.astype(bf16), w_ref[k], preferred_element_type=f32)

    # ---- stem: 3x3 / stride-2 conv folded into 4 taps over the space-to-depth input ----
    xv = x_ref[...]                                          # (ho+1, wo+1, STEM_K) bf16
    acc = jnp.zeros((m, LANES), f32)
    for t, (bh, bw) in enumerate(((0, 0), (0, 1), (1, 0), (1, 1))):
        xt = xv[bh:bh + ho, bw:bw + wo, :].reshape(m, STEM_K)
        acc = acc + jnp.dot(xt, stem_w_ref[t], preferred_element_type=f32)
    stem = _silu(acc + b_ref[B_STEM, :])                     # (m, 128) f32

    # ---- MBConv expand 1x1 + SiLU ----
    e = _silu(mxu(stem, W_EXP) + b_ref[B_EXP, :])            # (m, 128)

    # ---- depthwise 3x3, stride 1, pad 1 + SiLU (VMEM halo scratch, 9 VPU taps) ----
    epad_ref[...] = jnp.zeros_like(epad_ref)
    epad_ref[1:1 + ho, 1:1 + wo, :] = e.reshape(ho, wo, LANES)
    accd = jnp.zeros((ho, wo, LANES), f32)
    for kh in range(3):
        for kw in range(3):
            accd = accd + epad_ref[kh:kh + ho, kw:kw + wo, :] * dw_w_ref[kh * 3 + kw, :]
    d = _silu(accd + b_ref[B_DW, :]).reshape(m, LANES)       # (m, 128)

    # ---- squeeze-excite (fused, never leaves VMEM) ----
    gap = jnp.sum(d, axis=0, keepdims=True) * (1.0 / m)      # (1, 128)
    s1 = _silu(mxu(gap, W_SE1) + b_ref[B_SE1, :])
    s = _sigmoid(mxu(s1, W_SE2) + b_ref[B_SE2, :])           # (1, 128)
    ds = d * s

    # ---- 1x1 project (linear) + 1x1 head conv + SiLU ----
    p = mxu(ds, W_PROJ) + b_ref[B_PROJ, :]                   # (m, 128)
    hd = _silu(mxu(p, W_HEAD) + b_ref[B_HEAD, :])            # (m, 128)

    # ---- global average pool + Linear classifier (the replaced `model.classifier`) ----
    pooled = jnp.sum(hd, axis=0, keepdims=True) * (1.0 / m)  # (1, 128)
    logits = mxu(pooled, W_CLS) + b_ref[B_CLS, :]            # (1, 128)
    o_ref[...] = logits.astype(o_ref.dtype)


def _fused_forward_call(xs, packed, n, ho, wo):
    m = ho * wo
    flops_per_img = (
        2 * m * STEM_K * LANES * 4        # stem: 4 taps
        + 2 * m * LANES * LANES * 3       # expand, project, head
        + 2 * 9 * m * LANES               # depthwise
        + 2 * LANES * LANES * 3           # SE fc1, SE fc2, classifier
    )
    trans_per_img = 4 * m * LANES + 3 * LANES
    weight_bytes = sum(int(a.size) * a.dtype.itemsize
                       for a in (packed["stem_taps"], packed["dw_w"],
                                 packed["wmats"], packed["biases"]))
    bytes_accessed = int(xs.size) * xs.dtype.itemsize + weight_bytes + n * LANES * 4

    kernel = functools.partial(_effnet_fused_kernel, ho=ho, wo=wo)
    return pl.pallas_call(
        kernel,
        out_shape=jax.ShapeDtypeStruct((n, 1, LANES), jnp.float32),
        grid=(n,),
        in_specs=[
            pl.BlockSpec((None, ho + 1, wo + 1, STEM_K), lambda i: (i, 0, 0, 0)),
            pl.BlockSpec((4, STEM_K, LANES), lambda i: (0, 0, 0)),
            pl.BlockSpec((9, LANES), lambda i: (0, 0)),
            pl.BlockSpec((6, LANES, LANES), lambda i: (0, 0, 0)),
            pl.BlockSpec((8, LANES), lambda i: (0, 0)),
        ],
        out_specs=pl.BlockSpec((None, 1, LANES), lambda i: (i, 0, 0)),
        scratch_shapes=[pltpu.VMEM((ho + 2, wo + 2, LANES), jnp.float32)],
        compiler_params=pltpu.CompilerParams(
            dimension_semantics=("parallel",),          # shard batch across TCs on v7x
            vmem_limit_bytes=32 * 1024 * 1024,
        ),
        cost_estimate=pl.CostEstimate(
            flops=n * flops_per_img,
            transcendentals=n * trans_per_img,
            bytes_accessed=bytes_accessed,
        ),
    )(xs, packed["stem_taps"], packed["dw_w"], packed["wmats"], packed["biases"])


# ----------------------------------------------------------------------------
# Parameters: base (unpadded, f32) + packed (lane-padded, bf16) forms
# ----------------------------------------------------------------------------
def init_base_params(key, num_classes):
    ks = jax.random.split(key, 16)

    def w(k, shape, scale=0.25):
        return jax.random.normal(k, shape, jnp.float32) * scale

    return {
        "stem_w": w(ks[0], (3, 3, 3, C_STEM)),      "stem_b": w(ks[1], (C_STEM,), 0.1),
        "exp_w":  w(ks[2], (C_STEM, C_EXP)),        "exp_b":  w(ks[3], (C_EXP,), 0.1),
        "dw_w":   w(ks[4], (3, 3, C_EXP)),          "dw_b":   w(ks[5], (C_EXP,), 0.1),
        "se1_w":  w(ks[6], (C_EXP, C_SE)),          "se1_b":  w(ks[7], (C_SE,), 0.1),
        "se2_w":  w(ks[8], (C_SE, C_EXP)),          "se2_b":  w(ks[9], (C_EXP,), 0.1),
        "proj_w": w(ks[10], (C_EXP, C_PROJ)),       "proj_b": w(ks[11], (C_PROJ,), 0.1),
        "head_w": w(ks[12], (C_PROJ, C_HEAD)),      "head_b": w(ks[13], (C_HEAD,), 0.1),
        "cls_w":  w(ks[14], (C_HEAD, num_classes)), "cls_b":  w(ks[15], (num_classes,), 0.1),
    }


def pack_params(base, num_classes):
    f32 = np.float32
    # --- stem: fold stride-2 into 4 space-to-depth taps, pad Cout to 128 lanes ---
    sw = np.asarray(base["stem_w"], f32)                    # (kh, kw, cin, cout)
    taps = np.zeros((4, STEM_K, LANES), f32)
    for bh in range(2):
        for bw in range(2):
            for ir in range(2):
                for ic in range(2):
                    kh, kw = 2 * bh + ir, 2 * bw + ic
                    if kh < 3 and kw < 3:
                        c0 = ir * 6 + ic * 3                # channel = ir*6 + ic*3 + cin
                        taps[bh * 2 + bw, c0:c0 + 3, :C_STEM] = sw[kh, kw]

    def pad_mat(wm, rows, cols):
        out = np.zeros((LANES, LANES), f32)
        out[:rows, :cols] = np.asarray(wm, f32)
        return out

    def pad_vec(v):
        out = np.zeros((LANES,), f32)
        out[:np.asarray(v).shape[0]] = np.asarray(v, f32)
        return out

    wmats = np.stack([
        pad_mat(base["exp_w"], C_STEM, C_EXP),
        pad_mat(base["se1_w"], C_EXP, C_SE),
        pad_mat(base["se2_w"], C_SE, C_EXP),
        pad_mat(base["proj_w"], C_EXP, C_PROJ),
        pad_mat(base["head_w"], C_PROJ, C_HEAD),
        pad_mat(base["cls_w"], C_HEAD, num_classes),
    ])
    biases = np.stack([pad_vec(base[k]) for k in
                       ("stem_b", "exp_b", "dw_b", "se1_b", "se2_b",
                        "proj_b", "head_b", "cls_b")])
    dw = np.zeros((9, LANES), f32)
    dw[:, :C_EXP] = np.asarray(base["dw_w"], f32).reshape(9, C_EXP)

    return {
        "stem_taps": jnp.asarray(taps, jnp.bfloat16),       # MXU operand
        "dw_w": jnp.asarray(dw, jnp.float32),               # VPU operand
        "wmats": jnp.asarray(wmats, jnp.bfloat16),          # MXU operands
        "biases": jnp.asarray(biases, jnp.float32),         # f32 epilogues
    }


# ----------------------------------------------------------------------------
# Forward pass (wrapper does only layout glue; all compute in one pallas_call)
# ----------------------------------------------------------------------------
def efficientnet_forward(packed, x_nchw, num_classes):
    x = jnp.transpose(x_nchw, (0, 2, 3, 1)).astype(jnp.float32)   # NCHW -> NHWC
    n, h, w, cin = x.shape
    assert h % 2 == 0 and w % 2 == 0 and cin == 3
    ho, wo = h // 2, w // 2

    # space-to-depth of the padded input (pure layout, no data blow-up, no im2col)
    xp = jnp.pad(x, ((0, 0), (1, 1), (1, 1), (0, 0)))             # (n, h+2, w+2, 3)
    xs = (xp.reshape(n, ho + 1, 2, wo + 1, 2, cin)
            .transpose(0, 1, 3, 2, 4, 5)
            .reshape(n, ho + 1, wo + 1, 4 * cin))
    xs = jnp.pad(xs, ((0, 0), (0, 0), (0, 0), (0, STEM_K - 4 * cin))).astype(jnp.bfloat16)

    logits_pad = _fused_forward_call(xs, packed, n, ho, wo)       # (n, 1, 128)
    return logits_pad[:, 0, :num_classes]


# ----------------------------------------------------------------------------
# Pure-JAX reference (unpadded, f32) used only for a correctness check
# ----------------------------------------------------------------------------
def reference_forward(base, x_nchw):
    silu = lambda v: v * jax.nn.sigmoid(v)
    x = jnp.transpose(x_nchw, (0, 2, 3, 1)).astype(jnp.float32)
    n, h, w, cin = x.shape
    ho, wo = h // 2, w // 2
    xp = jnp.pad(x, ((0, 0), (1, 1), (1, 1), (0, 0)))
    cols = [xp[:, kh:kh + 2 * ho:2, kw:kw + 2 * wo:2, :]
            for kh in range(3) for kw in range(3)]
    patches = jnp.stack(cols, axis=3).reshape(n * ho * wo, 9 * cin)
    stem = silu(patches @ base["stem_w"].reshape(9 * cin, C_STEM) + base["stem_b"])
    e = silu(stem @ base["exp_w"] + base["exp_b"]).reshape(n, ho, wo, C_EXP)
    ep = jnp.pad(e, ((0, 0), (1, 1), (1, 1), (0, 0)))
    dconv = sum(ep[:, kh:kh + ho, kw:kw + wo, :] * base["dw_w"][kh, kw, :]
                for kh in range(3) for kw in range(3))
    d = silu(dconv + base["dw_b"])
    gap = jnp.mean(d, axis=(1, 2))
    s1 = silu(gap @ base["se1_w"] + base["se1_b"])
    s = jax.nn.sigmoid(s1 @ base["se2_w"] + base["se2_b"])
    ds = d * s[:, None, None, :]
    p = ds.reshape(n * ho * wo, C_EXP) @ base["proj_w"] + base["proj_b"]
    hd = silu(p @ base["head_w"] + base["head_b"]).reshape(n, ho, wo, C_HEAD)
    pooled = jnp.mean(hd, axis=(1, 2))
    return pooled @ base["cls_w"] + base["cls_b"]


# ----------------------------------------------------------------------------
if __name__ == "__main__":
    # num_classes in the original is len(os.listdir(dataset_dir)); use 10 here.
    num_classes = 10
    key = jax.random.PRNGKey(0)
    pkey, xkey = jax.random.split(key)
    base = init_base_params(pkey, num_classes)
    packed = pack_params(base, num_classes)

    x = jax.random.normal(xkey, (2, 3, 16, 16), jnp.float32)      # NCHW like PyTorch

    fwd = jax.jit(lambda inp: efficientnet_forward(packed, inp, num_classes))
    out = jax.block_until_ready(fwd(x))
    assert out.shape == (2, num_classes) and out.dtype == jnp.float32

    # correctness check vs. the f32 reference (tolerance covers bf16 MXU + approx recip)
    ref = reference_forward(base, x)
    err = float(jnp.max(jnp.abs(out - ref)))
    tol = 0.12 * float(jnp.max(jnp.abs(ref))) + 2e-3
    assert err < tol, f"kernel/reference mismatch: max|diff|={err:.4e} tol={tol:.4e}"

    print("KERNEL_OK")
</pallas_src>

<mosaic_0001>
module attributes {stable_mosaic.version = 11 : i64} {
  func.func @_effnet_fused_kernel(%arg0: i32, %arg1: memref<1x9x9x16xbf16, #tpu.memory_space<vmem>>, %arg2: memref<4x16x128xbf16, #tpu.memory_space<vmem>>, %arg3: memref<9x128xf32, #tpu.memory_space<vmem>>, %arg4: memref<6x128x128xbf16, #tpu.memory_space<vmem>>, %arg5: memref<8x128xf32, #tpu.memory_space<vmem>>, %arg6: memref<1x1x128xf32, #tpu.memory_space<vmem>>, %arg7: memref<10x10x128xf32, #tpu.memory_space<vmem>>) attributes {dimension_semantics = [#tpu.dimension_semantics<parallel>], iteration_bounds = array<i64: 2>, scalar_prefetch = 0 : i64, scratch_operands = 1 : i64, tpu.core_type = #tpu.core_type<tc>, window_params = [{transform_indices = @transform_0, window_bounds = array<i64: 1, 9, 9, 16>}, {pipeline_mode = #tpu.pipeline_mode<synchronous>, transform_indices = @transform_1, window_bounds = array<i64: 4, 16, 128>}, {pipeline_mode = #tpu.pipeline_mode<synchronous>, transform_indices = @transform_2, window_bounds = array<i64: 9, 128>}, {pipeline_mode = #tpu.pipeline_mode<synchronous>, transform_indices = @transform_3, window_bounds = array<i64: 6, 128, 128>}, {pipeline_mode = #tpu.pipeline_mode<synchronous>, transform_indices = @transform_4, window_bounds = array<i64: 8, 128>}, {transform_indices = @transform_5, window_bounds = array<i64: 1, 1, 128>}]} {
    %c0 = arith.constant 0 : index
    %c0_0 = arith.constant 0 : index
    %c0_1 = arith.constant 0 : index
    %c0_2 = arith.constant 0 : index
    %0 = vector.load %arg1[%c0, %c0_0, %c0_1, %c0_2] : memref<1x9x9x16xbf16, #tpu.memory_space<vmem>>, vector<1x9x9x16xbf16>
    %1 = vector.shape_cast %0 : vector<1x9x9x16xbf16> to vector<9x9x16xbf16>
    %cst = arith.constant 0.000000e+00 : f32
    %2 = vector.broadcast %cst : f32 to vector<64x128xf32>
    %3 = vector.extract_strided_slice %1 {offsets = [0, 0, 0], sizes = [8, 8, 16], strides = [1, 1, 1]} : vector<9x9x16xbf16> to vector<8x8x16xbf16>
    %4 = vector.shape_cast %3 : vector<8x8x16xbf16> to vector<64x16xbf16>
    %c0_3 = arith.constant 0 : index
    %c0_4 = arith.constant 0 : index
    %c0_5 = arith.constant 0 : index
    %5 = vector.load %arg2[%c0_3, %c0_4, %c0_5] : memref<4x16x128xbf16, #tpu.memory_space<vmem>>, vector<1x16x128xbf16>
    %6 = vector.shape_cast %5 : vector<1x16x128xbf16> to vector<16x128xbf16>
    %cst_6 = arith.constant dense<0.000000e+00> : vector<64x128xf32>
    %7 = tpu.matmul %4, %6, %cst_6 {dimension_numbers = #tpu.dot_dimension_numbers<[1], [0], [0], [1], [0, 0, 1, 1], [], []>} : vector<64x16xbf16>, vector<16x128xbf16>, vector<64x128xf32> -> vector<64x128xf32>
    %8 = arith.addf %2, %7 : vector<64x128xf32>
    %9 = vector.extract_strided_slice %1 {offsets = [0, 1, 0], sizes = [8, 8, 16], strides = [1, 1, 1]} : vector<9x9x16xbf16> to vector<8x8x16xbf16>
    %10 = vector.shape_cast %9 : vector<8x8x16xbf16> to vector<64x16xbf16>
    %c1 = arith.constant 1 : index
    %c0_7 = arith.constant 0 : index
    %c0_8 = arith.constant 0 : index
    %11 = vector.load %arg2[%c1, %c0_7, %c0_8] : memref<4x16x128xbf16, #tpu.memory_space<vmem>>, vector<1x16x128xbf16>
    %12 = vector.shape_cast %11 : vector<1x16x128xbf16> to vector<16x128xbf16>
    %cst_9 = arith.constant dense<0.000000e+00> : vector<64x128xf32>
    %13 = tpu.matmul %10, %12, %cst_9 {dimension_numbers = #tpu.dot_dimension_numbers<[1], [0], [0], [1], [0, 0, 1, 1], [], []>} : vector<64x16xbf16>, vector<16x128xbf16>, vector<64x128xf32> -> vector<64x128xf32>
    %14 = arith.addf %8, %13 : vector<64x128xf32>
    %15 = vector.extract_strided_slice %1 {offsets = [1, 0, 0], sizes = [8, 8, 16], strides = [1, 1, 1]} : vector<9x9x16xbf16> to vector<8x8x16xbf16>
    %16 = vector.shape_cast %15 : vector<8x8x16xbf16> to vector<64x16xbf16>
    %c2 = arith.constant 2 : index
    %c0_10 = arith.constant 0 : index
    %c0_11 = arith.constant 0 : index
    %17 = vector.load %arg2[%c2, %c0_10, %c0_11] : memref<4x16x128xbf16, #tpu.memory_space<vmem>>, vector<1x16x128xbf16>
    %18 = vector.shape_cast %17 : vector<1x16x128xbf16> to vector<16x128xbf16>
    %cst_12 = arith.constant dense<0.000000e+00> : vector<64x128xf32>
    %19 = tpu.matmul %16, %18, %cst_12 {dimension_numbers = #tpu.dot_dimension_numbers<[1], [0], [0], [1], [0, 0, 1, 1], [], []>} : vector<64x16xbf16>, vector<16x128xbf16>, vector<64x128xf32> -> vector<64x128xf32>
    %20 = arith.addf %14, %19 : vector<64x128xf32>
    %21 = vector.extract_strided_slice %1 {offsets = [1, 1, 0], sizes = [8, 8, 16], strides = [1, 1, 1]} : vector<9x9x16xbf16> to vector<8x8x16xbf16>
    %22 = vector.shape_cast %21 : vector<8x8x16xbf16> to vector<64x16xbf16>
    %c3 = arith.constant 3 : index
    %c0_13 = arith.constant 0 : index
    %c0_14 = arith.constant 0 : index
    %23 = vector.load %arg2[%c3, %c0_13, %c0_14] : memref<4x16x128xbf16, #tpu.memory_space<vmem>>, vector<1x16x128xbf16>
    %24 = vector.shape_cast %23 : vector<1x16x128xbf16> to vector<16x128xbf16>
    %cst_15 = arith.constant dense<0.000000e+00> : vector<64x128xf32>
    %25 = tpu.matmul %22, %24, %cst_15 {dimension_numbers = #tpu.dot_dimension_numbers<[1], [0], [0], [1], [0, 0, 1, 1], [], []>} : vector<64x16xbf16>, vector<16x128xbf16>, vector<64x128xf32> -> vector<64x128xf32>
    %26 = arith.addf %20, %25 : vector<64x128xf32>
    %c0_16 = arith.constant 0 : index
    %c0_17 = arith.constant 0 : index
    %27 = vector.load %arg5[%c0_16, %c0_17] : memref<8x128xf32, #tpu.memory_space<vmem>>, vector<1x128xf32>
    %28 = vector.shape_cast %27 : vector<1x128xf32> to vector<128xf32>
    %29 = vector.shape_cast %28 : vector<128xf32> to vector<1x128xf32>
    %30 = vector.broadcast %29 : vector<1x128xf32> to vector<64x128xf32>
    %31 = arith.addf %26, %30 : vector<64x128xf32>
    %cst_18 = arith.constant 0.000000e+00 : f32
    %32 = vector.broadcast %cst_18 : f32 to vector<64x128xf32>
    %33 = arith.subf %32, %31 : vector<64x128xf32>
    %34 = math.exp %33 : vector<64x128xf32>
    %cst_19 = arith.constant 1.000000e+00 : f32
    %35 = vector.broadcast %cst_19 : f32 to vector<64x128xf32>
    %36 = arith.addf %35, %34 : vector<64x128xf32>
    %37 = tpu.reciprocal %36 {approx = true} : vector<64x128xf32> -> vector<64x128xf32>
    %38 = arith.mulf %31, %37 : vector<64x128xf32>
    %39 = arith.truncf %38 : vector<64x128xf32> to vector<64x128xbf16>
    %c0_20 = arith.constant 0 : index
    %c0_21 = arith.constant 0 : index
    %c0_22 = arith.constant 0 : index
    %40 = vector.load %arg4[%c0_20, %c0_21, %c0_22] : memref<6x128x128xbf16, #tpu.memory_space<vmem>>, vector<1x128x128xbf16>
    %41 = vector.shape_cast %40 : vector<1x128x128xbf16> to vector<128x128xbf16>
    %cst_23 = arith.constant dense<0.000000e+00> : vector<64x128xf32>
    %42 = tpu.matmul %39, %41, %cst_23 {dimension_numbers = #tpu.dot_dimension_numbers<[1], [0], [0], [1], [0, 0, 1, 1], [], []>} : vector<64x128xbf16>, vector<128x128xbf16>, vector<64x128xf32> -> vector<64x128xf32>
    %c1_24 = arith.constant 1 : index
    %c0_25 = arith.constant 0 : index
    %43 = vector.load %arg5[%c1_24, %c0_25] : memref<8x128xf32, #tpu.memory_space<vmem>>, vector<1x128xf32>
    %44 = vector.shape_cast %43 : vector<1x128xf32> to vector<128xf32>
    %45 = vector.shape_cast %44 : vector<128xf32> to vector<1x128xf32>
    %46 = vector.broadcast %45 : vector<1x128xf32> to vector<64x128xf32>
    %47 = arith.addf %42, %46 : vector<64x128xf32>
    %cst_26 = arith.constant 0.000000e+00 : f32
    %48 = vector.broadcast %cst_26 : f32 to vector<64x128xf32>
    %49 = arith.subf %48, %47 : vector<64x128xf32>
    %50 = math.exp %49 : vector<64x128xf32>
    %cst_27 = arith.constant 1.000000e+00 : f32
    %51 = vector.broadcast %cst_27 : f32 to vector<64x128xf32>
    %52 = arith.addf %51, %50 : vector<64x128xf32>
    %53 = tpu.reciprocal %52 {approx = true} : vector<64x128xf32> -> vector<64x128xf32>
    %54 = arith.mulf %47, %53 : vector<64x128xf32>
    %cst_28 = arith.constant 0.000000e+00 : f32
    %55 = vector.broadcast %cst_28 : f32 to vector<10x10x128xf32>
    %c0_29 = arith.constant 0 : index
    %c0_30 = arith.constant 0 : index
    %c0_31 = arith.constant 0 : index
    %56 = vector.load %arg7[%c0_29, %c0_30, %c0_31] : memref<10x10x128xf32, #tpu.memory_space<vmem>>, vector<10x10x128xf32>
    tpu.vector_store %arg7[%c0_29, %c0_30, %c0_31], %55 {strides = array<i32>} : memref<10x10x128xf32, #tpu.memory_space<vmem>>, vector<10x10x128xf32>,
    %57 = vector.shape_cast %54 : vector<64x128xf32> to vector<8x8x128xf32>
    %c1_32 = arith.constant 1 : index
    %c1_33 = arith.constant 1 : index
    %c0_34 = arith.constant 0 : index
    %58 = vector.load %arg7[%c1_32, %c1_33, %c0_34] : memref<10x10x128xf32, #tpu.memory_space<vmem>>, vector<8x8x128xf32>
    tpu.vector_store %arg7[%c1_32, %c1_33, %c0_34], %57 {strides = array<i32>} : memref<10x10x128xf32, #tpu.memory_space<vmem>>, vector<8x8x128xf32>,
    %cst_35 = arith.constant 0.000000e+00 : f32
    %59 = vector.broadcast %cst_35 : f32 to vector<8x8x128xf32>
    %c0_36 = arith.constant 0 : index
    %c0_37 = arith.constant 0 : index
    %c0_38 = arith.constant 0 : index
    %60 = vector.load %arg7[%c0_36, %c0_37, %c0_38] : memref<10x10x128xf32, #tpu.memory_space<vmem>>, vector<8x8x128xf32>
    %c0_39 = arith.constant 0 : index
    %c0_40 = arith.constant 0 : index
    %61 = vector.load %arg3[%c0_39, %c0_40] : memref<9x128xf32, #tpu.memory_space<vmem>>, vector<1x128xf32>
    %62 = vector.shape_cast %61 : vector<1x128xf32> to vector<128xf32>
    %63 = vector.shape_cast %62 : vector<128xf32> to vector<1x1x128xf32>
    %64 = vector.broadcast %63 : vector<1x1x128xf32> to vector<8x8x128xf32>
    %65 = arith.mulf %60, %64 : vector<8x8x128xf32>
    %66 = arith.addf %59, %65 : vector<8x8x128xf32>
    %c0_41 = arith.constant 0 : index
    %c1_42 = arith.constant 1 : index
    %c0_43 = arith.constant 0 : index
    %67 = vector.load %arg7[%c0_41, %c1_42, %c0_43] : memref<10x10x128xf32, #tpu.memory_space<vmem>>, vector<8x8x128xf32>
    %c1_44 = arith.constant 1 : index
    %c0_45 = arith.constant 0 : index
    %68 = vector.load %arg3[%c1_44, %c0_45] : memref<9x128xf32, #tpu.memory_space<vmem>>, vector<1x128xf32>
    %69 = vector.shape_cast %68 : vector<1x128xf32> to vector<128xf32>
    %70 = vector.shape_cast %69 : vector<128xf32> to vector<1x1x128xf32>
    %71 = vector.broadcast %70 : vector<1x1x128xf32> to vector<8x8x128xf32>
    %72 = arith.mulf %67, %71 : vector<8x8x128xf32>
    %73 = arith.addf %66, %72 : vector<8x8x128xf32>
    %c0_46 = arith.constant 0 : index
    %c2_47 = arith.constant 2 : index
    %c0_48 = arith.constant 0 : index
    %74 = vector.load %arg7[%c0_46, %c2_47, %c0_48] : memref<10x10x128xf32, #tpu.memory_space<vmem>>, vector<8x8x128xf32>
    %c2_49 = arith.constant 2 : index
    %c0_50 = arith.constant 0 : index
    %75 = vector.load %arg3[%c2_49, %c0_50] : memref<9x128xf32, #tpu.memory_space<vmem>>, vector<1x128xf32>
    %76 = vector.shape_cast %75 : vector<1x128xf32> to vector<128xf32>
    %77 = vector.shape_cast %76 : vector<128xf32> to vector<1x1x128xf32>
    %78 = vector.broadcast %77 : vector<1x1x128xf32> to vector<8x8x128xf32>
    %79 = arith.mulf %74, %78 : vector<8x8x128xf32>
    %80 = arith.addf %73, %79 : vector<8x8x128xf32>
    %c1_51 = arith.constant 1 : index
    %c0_52 = arith.constant 0 : index
    %c0_53 = arith.constant 0 : index
    %81 = vector.load %arg7[%c1_51, %c0_52, %c0_53] : memref<10x10x128xf32, #tpu.memory_space<vmem>>, vector<8x8x128xf32>
    %c3_54 = arith.constant 3 : index
    %c0_55 = arith.constant 0 : index
    %82 = vector.load %arg3[%c3_54, %c0_55] : memref<9x128xf32, #tpu.memory_space<vmem>>, vector<1x128xf32>
    %83 = vector.shape_cast %82 : vector<1x128xf32> to vector<128xf32>
    %84 = vector.shape_cast %83 : vector<128xf32> to vector<1x1x128xf32>
    %85 = vector.broadcast %84 : vector<1x1x128xf32> to vector<8x8x128xf32>
    %86 = arith.mulf %81, %85 : vector<8x8x128xf32>
    %87 = arith.addf %80, %86 : vector<8x8x128xf32>
    %c1_56 = arith.constant 1 : index
    %c1_57 = arith.constant 1 : index
    %c0_58 = arith.constant 0 : index
    %88 = vector.load %arg7[%c1_56, %c1_57, %c0_58] : memref<10x10x128xf32, #tpu.memory_space<vmem>>, vector<8x8x128xf32>
    %c4 = arith.constant 4 : index
    %c0_59 = arith.constant 0 : index
    %89 = vector.load %arg3[%c4, %c0_59] : memref<9x128xf32, #tpu.memory_space<vmem>>, vector<1x128xf32>
    %90 = vector.shape_cast %89 : vector<1x128xf32> to vector<128xf32>
    %91 = vector.shape_cast %90 : vector<128xf32> to vector<1x1x128xf32>
    %92 = vector.broadcast %91 : vector<1x1x128xf32> to vector<8x8x128xf32>
    %93 = arith.mulf %88, %92 : vector<8x8x128xf32>
    %94 = arith.addf %87, %93 : vector<8x8x128xf32>
    %c1_60 = arith.constant 1 : index
    %c2_61 = arith.constant 2 : index
    %c0_62 = arith.constant 0 : index
    %95 = vector.load %arg7[%c1_60, %c2_61, %c0_62] : memref<10x10x128xf32, #tpu.memory_space<vmem>>, vector<8x8x128xf32>
    %c5 = arith.constant 5 : index
    %c0_63 = arith.constant 0 : index
    %96 = vector.load %arg3[%c5, %c0_63] : memref<9x128xf32, #tpu.memory_space<vmem>>, vector<1x128xf32>
    %97 = vector.shape_cast %96 : vector<1x128xf32> to vector<128xf32>
    %98 = vector.shape_cast %97 : vector<128xf32> to vector<1x1x128xf32>
    %99 = vector.broadcast %98 : vector<1x1x128xf32> to vector<8x8x128xf32>
    %100 = arith.mulf %95, %99 : vector<8x8x128xf32>
    %101 = arith.addf %94, %100 : vector<8x8x128xf32>
    %c2_64 = arith.constant 2 : index
    %c0_65 = arith.constant 0 : index
    %c0_66 = arith.constant 0 : index
    %102 = vector.load %arg7[%c2_64, %c0_65, %c0_66] : memref<10x10x128xf32, #tpu.memory_space<vmem>>, vector<8x8x128xf32>
    %c6 = arith.constant 6 : index
    %c0_67 = arith.constant 0 : index
    %103 = vector.load %arg3[%c6, %c0_67] : memref<9x128xf32, #tpu.memory_space<vmem>>, vector<1x128xf32>
    %104 = vector.shape_cast %103 : vector<1x128xf32> to vector<128xf32>
    %105 = vector.shape_cast %104 : vector<128xf32> to vector<1x1x128xf32>
    %106 = vector.broadcast %105 : vector<1x1x128xf32> to vector<8x8x128xf32>
    %107 = arith.mulf %102, %106 : vector<8x8x128xf32>
    %108 = arith.addf %101, %107 : vector<8x8x128xf32>
    %c2_68 = arith.constant 2 : index
    %c1_69 = arith.constant 1 : index
    %c0_70 = arith.constant 0 : index
    %109 = vector.load %arg7[%c2_68, %c1_69, %c0_70] : memref<10x10x128xf32, #tpu.memory_space<vmem>>, vector<8x8x128xf32>
    %c7 = arith.constant 7 : index
    %c0_71 = arith.constant 0 : index
    %110 = vector.load %arg3[%c7, %c0_71] : memref<9x128xf32, #tpu.memory_space<vmem>>, vector<1x128xf32>
    %111 = vector.shape_cast %110 : vector<1x128xf32> to vector<128xf32>
    %112 = vector.shape_cast %111 : vector<128xf32> to vector<1x1x128xf32>
    %113 = vector.broadcast %112 : vector<1x1x128xf32> to vector<8x8x128xf32>
    %114 = arith.mulf %109, %113 : vector<8x8x128xf32>
    %115 = arith.addf %108, %114 : vector<8x8x128xf32>
    %c2_72 = arith.constant 2 : index
    %c2_73 = arith.constant 2 : index
    %c0_74 = arith.constant 0 : index
    %116 = vector.load %arg7[%c2_72, %c2_73, %c0_74] : memref<10x10x128xf32, #tpu.memory_space<vmem>>, vector<8x8x128xf32>
    %c8 = arith.constant 8 : index
    %c0_75 = arith.constant 0 : index
    %117 = vector.load %arg3[%c8, %c0_75] : memref<9x128xf32, #tpu.memory_space<vmem>>, vector<1x128xf32>
    %118 = vector.shape_cast %117 : vector<1x128xf32> to vector<128xf32>
    %119 = vector.shape_cast %118 : vector<128xf32> to vector<1x1x128xf32>
    %120 = vector.broadcast %119 : vector<1x1x128xf32> to vector<8x8x128xf32>
    %121 = arith.mulf %116, %120 : vector<8x8x128xf32>
    %122 = arith.addf %115, %121 : vector<8x8x128xf32>
    %c2_76 = arith.constant 2 : index
    %c0_77 = arith.constant 0 : index
    %123 = vector.load %arg5[%c2_76, %c0_77] : memref<8x128xf32, #tpu.memory_space<vmem>>, vector<1x128xf32>
    %124 = vector.shape_cast %123 : vector<1x128xf32> to vector<128xf32>
    %125 = vector.shape_cast %124 : vector<128xf32> to vector<1x1x128xf32>
    %126 = vector.broadcast %125 : vector<1x1x128xf32> to vector<8x8x128xf32>
    %127 = arith.addf %122, %126 : vector<8x8x128xf32>
    %cst_78 = arith.constant 0.000000e+00 : f32
    %128 = vector.broadcast %cst_78 : f32 to vector<8x8x128xf32>
    %129 = arith.subf %128, %127 : vector<8x8x128xf32>
    %130 = math.exp %129 : vector<8x8x128xf32>
    %cst_79 = arith.constant 1.000000e+00 : f32
    %131 = vector.broadcast %cst_79 : f32 to vector<8x8x128xf32>
    %132 = arith.addf %131, %130 : vector<8x8x128xf32>
    %133 = tpu.reciprocal %132 {approx = true} : vector<8x8x128xf32> -> vector<8x8x128xf32>
    %134 = arith.mulf %127, %133 : vector<8x8x128xf32>
    %135 = vector.shape_cast %134 : vector<8x8x128xf32> to vector<64x128xf32>
    %cst_80 = arith.constant dense<0.000000e+00> : vector<128xf32>
    %136 = vector.multi_reduction <add>, %135, %cst_80 [0] : vector<64x128xf32> to vector<128xf32>
    %137 = vector.shape_cast %136 : vector<128xf32> to vector<1x128xf32>
    %cst_81 = arith.constant 1.562500e-02 : f32
    %138 = vector.broadcast %cst_81 : f32 to vector<1x128xf32>
    %139 = arith.mulf %137, %138 : vector<1x128xf32>
    %140 = arith.truncf %139 : vector<1x128xf32> to vector<1x128xbf16>
    %c1_82 = arith.constant 1 : index
    %c0_83 = arith.constant 0 : index
    %c0_84 = arith.constant 0 : index
    %141 = vector.load %arg4[%c1_82, %c0_83, %c0_84] : memref<6x128x128xbf16, #tpu.memory_space<vmem>>, vector<1x128x128xbf16>
    %142 = vector.shape_cast %141 : vector<1x128x128xbf16> to vector<128x128xbf16>
    %cst_85 = arith.constant dense<0.000000e+00> : vector<1x128xf32>
    %143 = tpu.matmul %140, %142, %cst_85 {dimension_numbers = #tpu.dot_dimension_numbers<[1], [0], [0], [1], [0, 0, 1, 1], [], []>} : vector<1x128xbf16>, vector<128x128xbf16>, vector<1x128xf32> -> vector<1x128xf32>
    %c3_86 = arith.constant 3 : index
    %c0_87 = arith.constant 0 : index
    %144 = vector.load %arg5[%c3_86, %c0_87] : memref<8x128xf32, #tpu.memory_space<vmem>>, vector<1x128xf32>
    %145 = vector.shape_cast %144 : vector<1x128xf32> to vector<128xf32>
    %146 = vector.shape_cast %145 : vector<128xf32> to vector<1x128xf32>
    %147 = arith.addf %143, %146 : vector<1x128xf32>
    %cst_88 = arith.constant 0.000000e+00 : f32
    %148 = vector.broadcast %cst_88 : f32 to vector<1x128xf32>
    %149 = arith.subf %148, %147 : vector<1x128xf32>
    %150 = math.exp %149 : vector<1x128xf32>
    %cst_89 = arith.constant 1.000000e+00 : f32
    %151 = vector.broadcast %cst_89 : f32 to vector<1x128xf32>
    %152 = arith.addf %151, %150 : vector<1x128xf32>
    %153 = tpu.reciprocal %152 {approx = true} : vector<1x128xf32> -> vector<1x128xf32>
    %154 = arith.mulf %147, %153 : vector<1x128xf32>
    %155 = arith.truncf %154 : vector<1x128xf32> to vector<1x128xbf16>
    %c2_90 = arith.constant 2 : index
    %c0_91 = arith.constant 0 : index
    %c0_92 = arith.constant 0 : index
    %156 = vector.load %arg4[%c2_90, %c0_91, %c0_92] : memref<6x128x128xbf16, #tpu.memory_space<vmem>>, vector<1x128x128xbf16>
    %157 = vector.shape_cast %156 : vector<1x128x128xbf16> to vector<128x128xbf16>
    %cst_93 = arith.constant dense<0.000000e+00> : vector<1x128xf32>
    %158 = tpu.matmul %155, %157, %cst_93 {dimension_numbers = #tpu.dot_dimension_numbers<[1], [0], [0], [1], [0, 0, 1, 1], [], []>} : vector<1x128xbf16>, vector<128x128xbf16>, vector<1x128xf32> -> vector<1x128xf32>
    %c4_94 = arith.constant 4 : index
    %c0_95 = arith.constant 0 : index
    %159 = vector.load %arg5[%c4_94, %c0_95] : memref<8x128xf32, #tpu.memory_space<vmem>>, vector<1x128xf32>
    %160 = vector.shape_cast %159 : vector<1x128xf32> to vector<128xf32>
    %161 = vector.shape_cast %160 : vector<128xf32> to vector<1x128xf32>
    %162 = arith.addf %158, %161 : vector<1x128xf32>
    %cst_96 = arith.constant 0.000000e+00 : f32
    %163 = vector.broadcast %cst_96 : f32 to vector<1x128xf32>
    %164 = arith.subf %163, %162 : vector<1x128xf32>
    %165 = math.exp %164 : vector<1x128xf32>
    %cst_97 = arith.constant 1.000000e+00 : f32
    %166 = vector.broadcast %cst_97 : f32 to vector<1x128xf32>
    %167 = arith.addf %166, %165 : vector<1x128xf32>
    %168 = tpu.reciprocal %167 {approx = true} : vector<1x128xf32> -> vector<1x128xf32>
    %169 = vector.broadcast %168 : vector<1x128xf32> to vector<64x128xf32>
    %170 = arith.mulf %135, %169 : vector<64x128xf32>
    %171 = arith.truncf %170 : vector<64x128xf32> to vector<64x128xbf16>
    %c3_98 = arith.constant 3 : index
    %c0_99 = arith.constant 0 : index
    %c0_100 = arith.constant 0 : index
    %172 = vector.load %arg4[%c3_98, %c0_99, %c0_100] : memref<6x128x128xbf16, #tpu.memory_space<vmem>>, vector<1x128x128xbf16>
    %173 = vector.shape_cast %172 : vector<1x128x128xbf16> to vector<128x128xbf16>
    %cst_101 = arith.constant dense<0.000000e+00> : vector<64x128xf32>
    %174 = tpu.matmul %171, %173, %cst_101 {dimension_numbers = #tpu.dot_dimension_numbers<[1], [0], [0], [1], [0, 0, 1, 1], [], []>} : vector<64x128xbf16>, vector<128x128xbf16>, vector<64x128xf32> -> vector<64x128xf32>
    %c5_102 = arith.constant 5 : index
    %c0_103 = arith.constant 0 : index
    %175 = vector.load %arg5[%c5_102, %c0_103] : memref<8x128xf32, #tpu.memory_space<vmem>>, vector<1x128xf32>
    %176 = vector.shape_cast %175 : vector<1x128xf32> to vector<128xf32>
    %177 = vector.shape_cast %176 : vector<128xf32> to vector<1x128xf32>
    %178 = vector.broadcast %177 : vector<1x128xf32> to vector<64x128xf32>
    %179 = arith.addf %174, %178 : vector<64x128xf32>
    %180 = arith.truncf %179 : vector<64x128xf32> to vector<64x128xbf16>
    %c4_104 = arith.constant 4 : index
    %c0_105 = arith.constant 0 : index
    %c0_106 = arith.constant 0 : index
    %181 = vector.load %arg4[%c4_104, %c0_105, %c0_106] : memref<6x128x128xbf16, #tpu.memory_space<vmem>>, vector<1x128x128xbf16>
    %182 = vector.shape_cast %181 : vector<1x128x128xbf16> to vector<128x128xbf16>
    %cst_107 = arith.constant dense<0.000000e+00> : vector<64x128xf32>
    %183 = tpu.matmul %180, %182, %cst_107 {dimension_numbers = #tpu.dot_dimension_numbers<[1], [0], [0], [1], [0, 0, 1, 1], [], []>} : vector<64x128xbf16>, vector<128x128xbf16>, vector<64x128xf32> -> vector<64x128xf32>
    %c6_108 = arith.constant 6 : index
    %c0_109 = arith.constant 0 : index
    %184 = vector.load %arg5[%c6_108, %c0_109] : memref<8x128xf32, #tpu.memory_space<vmem>>, vector<1x128xf32>
    %185 = vector.shape_cast %184 : vector<1x128xf32> to vector<128xf32>
    %186 = vector.shape_cast %185 : vector<128xf32> to vector<1x128xf32>
    %187 = vector.broadcast %186 : vector<1x128xf32> to vector<64x128xf32>
    %188 = arith.addf %183, %187 : vector<64x128xf32>
    %cst_110 = arith.constant 0.000000e+00 : f32
    %189 = vector.broadcast %cst_110 : f32 to vector<64x128xf32>
    %190 = arith.subf %189, %188 : vector<64x128xf32>
    %191 = math.exp %190 : vector<64x128xf32>
    %cst_111 = arith.constant 1.000000e+00 : f32
    %192 = vector.broadcast %cst_111 : f32 to vector<64x128xf32>
    %193 = arith.addf %192, %191 : vector<64x128xf32>
    %194 = tpu.reciprocal %193 {approx = true} : vector<64x128xf32> -> vector<64x128xf32>
    %195 = arith.mulf %188, %194 : vector<64x128xf32>
    %cst_112 = arith.constant dense<0.000000e+00> : vector<128xf32>
    %196 = vector.multi_reduction <add>, %195, %cst_112 [0] : vector<64x128xf32> to vector<128xf32>
    %197 = vector.shape_cast %196 : vector<128xf32> to vector<1x128xf32>
    %cst_113 = arith.constant 1.562500e-02 : f32
    %198 = vector.broadcast %cst_113 : f32 to vector<1x128xf32>
    %199 = arith.mulf %197, %198 : vector<1x128xf32>
    %200 = arith.truncf %199 : vector<1x128xf32> to vector<1x128xbf16>
    %c5_114 = arith.constant 5 : index
    %c0_115 = arith.constant 0 : index
    %c0_116 = arith.constant 0 : index
    %201 = vector.load %arg4[%c5_114, %c0_115, %c0_116] : memref<6x128x128xbf16, #tpu.memory_space<vmem>>, vector<1x128x128xbf16>
    %202 = vector.shape_cast %201 : vector<1x128x128xbf16> to vector<128x128xbf16>
    %cst_117 = arith.constant dense<0.000000e+00> : vector<1x128xf32>
    %203 = tpu.matmul %200, %202, %cst_117 {dimension_numbers = #tpu.dot_dimension_numbers<[1], [0], [0], [1], [0, 0, 1, 1], [], []>} : vector<1x128xbf16>, vector<128x128xbf16>, vector<1x128xf32> -> vector<1x128xf32>
    %c7_118 = arith.constant 7 : index
    %c0_119 = arith.constant 0 : index
    %204 = vector.load %arg5[%c7_118, %c0_119] : memref<8x128xf32, #tpu.memory_space<vmem>>, vector<1x128xf32>
    %205 = vector.shape_cast %204 : vector<1x128xf32> to vector<128xf32>
    %206 = vector.shape_cast %205 : vector<128xf32> to vector<1x128xf32>
    %207 = arith.addf %203, %206 : vector<1x128xf32>
    %c0_120 = arith.constant 0 : index
    %c0_121 = arith.constant 0 : index
    %c0_122 = arith.constant 0 : index
    %208 = vector.load %arg6[%c0_120, %c0_121, %c0_122] : memref<1x1x128xf32, #tpu.memory_space<vmem>>, vector<1x1x128xf32>
    %209 = vector.shape_cast %208 : vector<1x1x128xf32> to vector<1x128xf32>
    %210 = vector.shape_cast %207 : vector<1x128xf32> to vector<1x1x128xf32>
    tpu.vector_store %arg6[%c0_120, %c0_121, %c0_122], %210 {strides = array<i32>} : memref<1x1x128xf32, #tpu.memory_space<vmem>>, vector<1x1x128xf32>,
    return
  }
  func.func @transform_0(%arg0: i32) -> (i32, i32, i32, i32) {
    %c0_i32 = arith.constant 0 : i32
    %c0_i32_0 = arith.constant 0 : i32
    %c0_i32_1 = arith.constant 0 : i32
    %c0_i32_2 = arith.constant 0 : i32
    return %arg0, %c0_i32, %c0_i32_0, %c0_i32_1 : i32, i32, i32, i32
  }
  func.func @transform_1(%arg0: i32) -> (i32, i32, i32) {
    %c0_i32 = arith.constant 0 : i32
    %c0_i32_0 = arith.constant 0 : i32
    %c0_i32_1 = arith.constant 0 : i32
    %c0_i32_2 = arith.constant 0 : i32
    return %c0_i32, %c0_i32_0, %c0_i32_1 : i32, i32, i32
  }
  func.func @transform_2(%arg0: i32) -> (i32, i32) {
    %c0_i32 = arith.constant 0 : i32
    %c0_i32_0 = arith.constant 0 : i32
    %c0_i32_1 = arith.constant 0 : i32
    return %c0_i32, %c0_i32_0 : i32, i32
  }
  func.func @transform_3(%arg0: i32) -> (i32, i32, i32) {
    %c0_i32 = arith.constant 0 : i32
    %c0_i32_0 = arith.constant 0 : i32
    %c0_i32_1 = arith.constant 0 : i32
    %c0_i32_2 = arith.constant 0 : i32
    return %c0_i32, %c0_i32_0, %c0_i32_1 : i32, i32, i32
  }
  func.func @transform_4(%arg0: i32) -> (i32, i32) {
    %c0_i32 = arith.constant 0 : i32
    %c0_i32_0 = arith.constant 0 : i32
    %c0_i32_1 = arith.constant 0 : i32
    return %c0_i32, %c0_i32_0 : i32, i32
  }
  func.func @transform_5(%arg0: i32) -> (i32, i32, i32) {
    %c0_i32 = arith.constant 0 : i32
    %c0_i32_0 = arith.constant 0 : i32
    %c0_i32_1 = arith.constant 0 : i32
    return %arg0, %c0_i32, %c0_i32_0 : i32, i32, i32
  }
}

</mosaic_0001>

<llo_original>
// kernel: _lambda_.1
$region0: #{_lambda_.1}
  #allocation0 [shape = 'u32[]', space=smem, size = 0x4, offset = 0x4, fixed_abs, tag = 'smem constant byte address 0x4 - core index']
  #allocation1 [shape = 'u32[144,128]{1,0:T(1,128)}', space=vmem, size = 0x12000, scoped, tag = 'internal scratch']
  #allocation2 [shape = 'f32[10,10,128]{2,1,0:T(8,128)}', space=vmem, size = 0x14000, scoped, tag = 'scratch operand']
  %s0 = inlined_call_operand.vmem [shape: bf16[2,9,9,16], index: 0, kind: input, shape index: {}]
  %s1 = inlined_call_operand.vmem [shape: bf16[4,16,128], index: 1, kind: input, shape index: {}]
  %s2 = inlined_call_operand.vmem [shape: f32[9,128], index: 2, kind: input, shape index: {}]
  %s3 = inlined_call_operand.vmem [shape: bf16[6,128,128], index: 3, kind: input, shape index: {}]
  %s4 = inlined_call_operand.vmem [shape: f32[8,128], index: 4, kind: input, shape index: {}]
  %s5 = inlined_call_operand.hbm [shape: f32[2,1,128], index: 5, kind: output, shape index: {}]
  %s6 = sld [smem:[#allocation0]]
  $region53: #{_lambda_.1} parent=0
    _
  %s8 = ssub.s32 1, %s6
  %s9 = scalar_select 0, %s8, %s6
  $region1: #{_lambda_.1} parent=0
    #allocation3 [shape = 'u8[1024]{0}', space=vmem, size = 0x400, scoped, tag = 'output window, operand 0']
    #allocation4 [shape = 's32[2]{0}', space=sflag, size = 0x8, scoped, tag = 'scoped memory for _lambda_.1']
    %10 = vsyncpa [#allocation4], 0
    %s11 = scalar_lea.sflag [#allocation4], 1
    %12 = vsyncpa %s11, 0
    loop: start=0, step=1, limit=4
    $region2: #{_lambda_.1} parent=1 // loop_pre_header
      _
    $region3: #{_lambda_.1} parent=1 // loop_header
      %s14 = sphi 0, %s18
      %p15 = scmp.ge.s32.totalorder %s14, 4
      %s24 = sphi 0, %s26
      %s27 = sphi 0, %s24
      %s28 = sphi 0, %s27
      %s44 = sphi 0, %s28
      %s48 = sphi 0, %s48
      %s50 = sphi 0, %s48
      %s51 = sphi 0, %s50
      %s65 = sphi 0, %s51
      %s69 = sphi 0, %s69
      %s71 = sphi 0, %s69
      %s72 = sphi 0, %s71
      %s86 = sphi 0, %s72
      %s90 = sphi 0, %s90
      %s92 = sphi 0, %s90
      %s93 = sphi 0, %s92
      %s107 = sphi 0, %s93
      %s111 = sphi 0, %s111
      %s113 = sphi 0, %s111
      %s114 = sphi 0, %s113
      %s128 = sphi 0, %s114
      %s134 = sphi 0, %s136
      %s137 = sphi 0, %s134
      %s138 = sphi 0, %s137
      %s154 = sphi 0, %s138
    $region4: #{_lambda_.1} parent=1 // loop_header_branch
      %17 = sbr.rel (%p15) target = $region8
    $region5: #{_lambda_.1} parent=1 // loop_body
      %s19 = ssub.s32 %s14, 1
      %s20 = ssub.s32 %s14, 2
      %s21 = sadd.s32 %s14, 1
      %s22 = ssub.s32 %s14, %s21
      %p23 = scmp.eq.s32.totalorder %s22, 0
      %s25 = sadd.s32 %s24, 1
      %s26 = scalar_select %p23, %s24, %s25
      %p29 = pneg %p23
      %p30 = scmp.eq.s32.totalorder %s14, 1
      %p31 = por %p29, %p30
      %p32 = scmp.ne.s32.totalorder %s24, %s27
      %p33 = scmp.eq.s32.totalorder %s14, 0
      %p34 = por %p32, %p33
      %p35 = scmp.ne.s32.totalorder %s24, %s27
      %p36 = scmp.eq.s32.totalorder %s19, 1
      %p37 = por %p35, %p36
      %p38 = scmp.ne.s32.totalorder %s27, %s28
      %p39 = scmp.eq.s32.totalorder %s19, 0
      %p40 = por %p38, %p39
      %p41 = scmp.ne.s32.totalorder %s27, %s28
      %p42 = scmp.eq.s32.totalorder %s20, 1
      %p43 = por %p41, %p42
      %p45 = scmp.ne.s32.totalorder %s28, %s44
      %p46 = scmp.eq.s32.totalorder %s20, 0
      %p47 = por %p45, %p46
      %s49 = sadd.s32 %s48, 1
      %p52 = scmp.eq.s32.totalorder %s14, 1
      %p53 = scmp.ne.s32.totalorder %s48, %s50
      %p54 = scmp.eq.s32.totalorder %s14, 0
      %p55 = por %p53, %p54
      %p56 = scmp.ne.s32.totalorder %s48, %s50
      %p57 = scmp.eq.s32.totalorder %s19, 1
      %p58 = por %p56, %p57
      %p59 = scmp.ne.s32.totalorder %s50, %s51
      %p60 = scmp.eq.s32.totalorder %s19, 0
      %p61 = por %p59, %p60
      %p62 = scmp.ne.s32.totalorder %s50, %s51
      %p63 = scmp.eq.s32.totalorder %s20, 1
      %p64 = por %p62, %p63
      %p66 = scmp.ne.s32.totalorder %s51, %s65
      %p67 = scmp.eq.s32.totalorder %s20, 0
      %p68 = por %p66, %p67
      %s70 = sadd.s32 %s69, 1
      %p73 = scmp.eq.s32.totalorder %s14, 1
      %p74 = scmp.ne.s32.totalorder %s69, %s71
      %p75 = scmp.eq.s32.totalorder %s14, 0
      %p76 = por %p74, %p75
      %p77 = scmp.ne.s32.totalorder %s69, %s71
      %p78 = scmp.eq.s32.totalorder %s19, 1
      %p79 = por %p77, %p78
      %p80 = scmp.ne.s32.totalorder %s71, %s72
      %p81 = scmp.eq.s32.totalorder %s19, 0
      %p82 = por %p80, %p81
      %p83 = scmp.ne.s32.totalorder %s71, %s72
      %p84 = scmp.eq.s32.totalorder %s20, 1
      %p85 = por %p83, %p84
      %p87 = scmp.ne.s32.totalorder %s72, %s86
      %p88 = scmp.eq.s32.totalorder %s20, 0
      %p89 = por %p87, %p88
      %s91 = sadd.s32 %s90, 1
      %p94 = scmp.eq.s32.totalorder %s14, 1
      %p95 = scmp.ne.s32.totalorder %s90, %s92
      %p96 = scmp.eq.s32.totalorder %s14, 0
      %p97 = por %p95, %p96
      %p98 = scmp.ne.s32.totalorder %s90, %s92
      %p99 = scmp.eq.s32.totalorder %s19, 1
      %p100 = por %p98, %p99
      %p101 = scmp.ne.s32.totalorder %s92, %s93
      %p102 = scmp.eq.s32.totalorder %s19, 0
      %p103 = por %p101, %p102
      %p104 = scmp.ne.s32.totalorder %s92, %s93
      %p105 = scmp.eq.s32.totalorder %s20, 1
      %p106 = por %p104, %p105
      %p108 = scmp.ne.s32.totalorder %s93, %s107
      %p109 = scmp.eq.s32.totalorder %s20, 0
      %p110 = por %p108, %p109
      %s112 = sadd.s32 %s111, 1
      %p115 = scmp.eq.s32.totalorder %s14, 1
      %p116 = scmp.ne.s32.totalorder %s111, %s113
      %p117 = scmp.eq.s32.totalorder %s14, 0
      %p118 = por %p116, %p117
      %p119 = scmp.ne.s32.totalorder %s111, %s113
      %p120 = scmp.eq.s32.totalorder %s19, 1
      %p121 = por %p119, %p120
      %p122 = scmp.ne.s32.totalorder %s113, %s114
      %p123 = scmp.eq.s32.totalorder %s19, 0
      %p124 = por %p122, %p123
      %p125 = scmp.ne.s32.totalorder %s113, %s114
      %p126 = scmp.eq.s32.totalorder %s20, 1
      %p127 = por %p125, %p126
      %p129 = scmp.ne.s32.totalorder %s114, %s128
      %p130 = scmp.eq.s32.totalorder %s20, 0
      %p131 = por %p129, %p130
      %s132 = ssub.s32 %s14, %s21
      %p133 = scmp.eq.s32.totalorder %s132, 0
      %s135 = sadd.s32 %s134, 1
      %s136 = scalar_select %p133, %s134, %s135
      %p139 = pneg %p133
      %p140 = scmp.eq.s32.totalorder %s14, 1
      %p141 = por %p139, %p140
      %p142 = scmp.ne.s32.totalorder %s134, %s137
      %p143 = scmp.eq.s32.totalorder %s14, 0
      %p144 = por %p142, %p143
      %p145 = scmp.ne.s32.totalorder %s134, %s137
      %p146 = scmp.eq.s32.totalorder %s19, 1
      %p147 = por %p145, %p146
      %p148 = scmp.ne.s32.totalorder %s137, %s138
      %p149 = scmp.eq.s32.totalorder %s19, 0
      %p150 = por %p148, %p149
      %p151 = scmp.ne.s32.totalorder %s137, %s138
      %p152 = scmp.eq.s32.totalorder %s20, 1
      %p153 = por %p151, %p152
      %p155 = scmp.ne.s32.totalorder %s138, %s154
      %p156 = scmp.eq.s32.totalorder %s20, 0
      %p157 = por %p155, %p156
      %p158 = scmp.le.s32.totalorder 1, %s14
      %p159 = scmp.lt.s32.totalorder %s14, 3
      %p160 = pnand %p158, %p159
      %p161 = pneg %p160
      // Predicated region
      $region9: #{_lambda_.1} parent=5 // pred_check
        _
      $region10: #{_lambda_.1} parent=5 // pred_check_branch
        %163 = sbr.rel (%p160) target = $region12
      $region11: #{_lambda_.1} parent=5 // pred_region
        %s164 = ssub.s32 %s14, 1
        // Predicated region
        $region13: #{_lambda_.1} parent=11 // pred_check
          %p165 = pneg %p61
        $region14: #{_lambda_.1} parent=11 // pred_check_branch
          %167 = sbr.rel (%p165) target = $region16
        $region15: #{_lambda_.1} parent=11 // pred_region
          _
        $region16: #{_lambda_.1} parent=11 // pred_fallthru
          _
        // Predicated region
        $region17: #{_lambda_.1} parent=11 // pred_check
          %p168 = pneg %p82
        $region18: #{_lambda_.1} parent=11 // pred_check_branch
          %170 = sbr.rel (%p168) target = $region20
        $region19: #{_lambda_.1} parent=11 // pred_region
          _
        $region20: #{_lambda_.1} parent=11 // pred_fallthru
          _
        // Predicated region
        $region21: #{_lambda_.1} parent=11 // pred_check
          %p171 = pneg %p103
        $region22: #{_lambda_.1} parent=11 // pred_check_branch
          %173 = sbr.rel (%p171) target = $region24
        $region23: #{_lambda_.1} parent=11 // pred_region
          _
        $region24: #{_lambda_.1} parent=11 // pred_fallthru
          _
        // Predicated region
        $region25: #{_lambda_.1} parent=11 // pred_check
          %p174 = pneg %p124
        $region26: #{_lambda_.1} parent=11 // pred_check_branch
          %176 = sbr.rel (%p174) target = $region28
        $region27: #{_lambda_.1} parent=11 // pred_region
          _
        $region28: #{_lambda_.1} parent=11 // pred_fallthru
          _
      $region12: #{_lambda_.1} parent=5 // pred_fallthru
        _
      %p177 = scmp.lt.s32.totalorder %s14, 2
      // Predicated region
      $region29: #{_lambda_.1} parent=5 // pred_check
        %p178 = pneg %p177
      $region30: #{_lambda_.1} parent=5 // pred_check_branch
        %180 = sbr.rel (%p178) target = $region32
      $region31: #{_lambda_.1} parent=5 // pred_region
        // Predicated region
        $region33: #{_lambda_.1} parent=31 // pred_check
          %p181 = pneg %p34
        $region34: #{_lambda_.1} parent=31 // pred_check_branch
          %183 = sbr.rel (%p181) target = $region36
        $region35: #{_lambda_.1} parent=31 // pred_region
          %p184 = scmp.lt.s32.totalorder %s14, 1
          %s185 = scalar_select %p184, %s14, 1
          %s186 = smul.addr %s185, 18
          %s187 = smul.addr %s186, 4
          %s188 = scalar_lea.vmem %s0, %s187
        $region36: #{_lambda_.1} parent=31 // pred_fallthru
          _
      $region32: #{_lambda_.1} parent=5 // pred_fallthru
        _
      %p189 = scmp.le.s32.totalorder 1, %s14
      %p190 = scmp.lt.s32.totalorder %s14, 3
      %p191 = pnand %p189, %p190
      %p192 = pneg %p191
      // Predicated region
      $region37: #{_lambda_.1} parent=5 // pred_check
        _
      $region38: #{_lambda_.1} parent=5 // pred_check_branch
        %194 = sbr.rel (%p191) target = $region40
      $region39: #{_lambda_.1} parent=5 // pred_region
        %s195 = ssub.s32 %s14, 1
        %p196 = scmp.lt.s32.totalorder %s19, 1
        %s197 = scalar_select %p196, %s19, 1
        %s198 = smul.addr %s197, 18
        %s199 = smul.addr %s198, 4
        %s200 = scalar_lea.vmem %s0, %s199
        %p201 = pneg %p40
        %p202 = pneg %p37
        %p203 = pneg %p61
        %p204 = pneg %p58
        %p205 = pneg %p82
        %p206 = pneg %p79
        %p207 = pneg %p103
        %p208 = pneg %p100
        %p209 = pneg %p124
        %p210 = pneg %p121
        %p211 = pneg %p150
        %p212 = pneg %p147
        %s213 = sand.u32 %s137, 1
        %s214 = scalar_lea.sflag [#allocation4], %s213
        %s215 = sand.u32 %s137, 1
        %s216 = scalar_lea.vmem [#allocation3], %s215
        %p217 = scmp.lt.s32.totalorder %s19, 1
        %s218 = scalar_select %p217, %s19, 1
        %s219 = smul.addr %s218, 18
        %s220 = smul.addr %s219, 4
        %s221 = scalar_lea.vmem %s0, %s220
        %v223 = vld [vmem:[%s221] sm:$0xf]
        %v224 = vld [vmem:[%s221 + $0x4] sm:$0x1]
        %v225 = vld [vmem:[%s221 + $0x8] sm:$0xf]
        %v226 = vld [vmem:[%s221 + $0xc] sm:$0x1]
        %v227 = vld [vmem:[%s221 + $0x10] sm:$0xf]
        %v228 = vld [vmem:[%s221 + $0x14] sm:$0x1]
        %v229 = vld [vmem:[%s221 + $0x18] sm:$0xf]
        %v230 = vld [vmem:[%s221 + $0x1c] sm:$0x1]
        %v231 = vld [vmem:[%s221 + $0x20] sm:$0xf]
        %v232 = vld [vmem:[%s221 + $0x24] sm:$0x1]
        %v233 = vld [vmem:[%s221 + $0x28] sm:$0xf]
        %v234 = vld [vmem:[%s221 + $0x2c] sm:$0x1]
        %v235 = vld [vmem:[%s221 + $0x30] sm:$0xf]
        %v236 = vld [vmem:[%s221 + $0x34] sm:$0x1]
        %v237 = vld [vmem:[%s221 + $0x38] sm:$0xf]
        %v238 = vld [vmem:[%s221 + $0x3c] sm:$0x1]
        %v239 = vld [vmem:[%s221 + $0x40] sm:$0xf]
        %v240 = vld [vmem:[%s221 + $0x44] sm:$0x1]
        %v241 = vld [vmem:[%s1] sm:$0xf]
        %v242 = vld [vmem:[%s1 + $0x4] sm:$0xf]
        %vm243 = vsmask.f32 3328
        %vm244 = vsmask.f32 7440
        %vm245 = vmor %vm243, %vm244
        %v247 = vshrl.u32 %v223, 16
        %v249 = vrot.slane %v247, 4
        %v250 = vshll.u32 %v223, 16
        %v252 = vrot.slane %v250, 5
        %v253 = vor.u32 %v249, %v252
        %v254 = vrot.slane %v253, 4
        %v256 = vshll.u32 %v224, 16
        %v258 = vrot.slane %v256, 5
        %v259 = vsel %vm245, %v254, %v258
        %v261 = vshrl.u32 %v225, 16
        %v263 = vrot.slane %v261, 4
        %v264 = vshll.u32 %v225, 16
        %v266 = vrot.slane %v264, 5
        %v267 = vor.u32 %v263, %v266
        %v268 = vrot.slane %v267, 4
        %v270 = vshll.u32 %v226, 16
        %v272 = vrot.slane %v270, 5
        %v273 = vsel %vm245, %v268, %v272
        %v275 = vshrl.u32 %v227, 16
        %v277 = vrot.slane %v275, 4
        %v278 = vshll.u32 %v227, 16
        %v280 = vrot.slane %v278, 5
        %v281 = vor.u32 %v277, %v280
        %v282 = vrot.slane %v281, 4
        %v284 = vshll.u32 %v228, 16
        %v286 = vrot.slane %v284, 5
        %v287 = vsel %vm245, %v282, %v286
        %v289 = vshrl.u32 %v229, 16
        %v291 = vrot.slane %v289, 4
        %v292 = vshll.u32 %v229, 16
        %v294 = vrot.slane %v292, 5
        %v295 = vor.u32 %v291, %v294
        %v296 = vrot.slane %v295, 4
        %v298 = vshll.u32 %v230, 16
        %v300 = vrot.slane %v298, 5
        %v301 = vsel %vm245, %v296, %v300
        %v303 = vshrl.u32 %v231, 16
        %v305 = vrot.slane %v303, 4
        %v306 = vshll.u32 %v231, 16
        %v308 = vrot.slane %v306, 5
        %v309 = vor.u32 %v305, %v308
        %v310 = vrot.slane %v309, 4
        %v312 = vshll.u32 %v232, 16
        %v314 = vrot.slane %v312, 5
        %v315 = vsel %vm245, %v310, %v314
        %v317 = vshrl.u32 %v233, 16
        %v319 = vrot.slane %v317, 4
        %v320 = vshll.u32 %v233, 16
        %v322 = vrot.slane %v320, 5
        %v323 = vor.u32 %v319, %v322
        %v324 = vrot.slane %v323, 4
        %v326 = vshll.u32 %v234, 16
        %v328 = vrot.slane %v326, 5
        %v329 = vsel %vm245, %v324, %v328
        %v331 = vshrl.u32 %v235, 16
        %v333 = vrot.slane %v331, 4
        %v334 = vshll.u32 %v235, 16
        %v336 = vrot.slane %v334, 5
        %v337 = vor.u32 %v333, %v336
        %v338 = vrot.slane %v337, 4
        %v340 = vshll.u32 %v236, 16
        %v342 = vrot.slane %v340, 5
        %v343 = vsel %vm245, %v338, %v342
        %v345 = vshrl.u32 %v237, 16
        %v347 = vrot.slane %v345, 4
        %v348 = vshll.u32 %v237, 16
        %v350 = vrot.slane %v348, 5
        %v351 = vor.u32 %v347, %v350
        %v352 = vrot.slane %v351, 4
        %v354 = vshll.u32 %v238, 16
        %v356 = vrot.slane %v354, 5
        %v357 = vsel %vm245, %v352, %v356
        %s358 = scalar_lea.vmem %s1, 8
        %v359 = vld [vmem:[%s358] sm:$0xf]
        %v360 = vld [vmem:[%s358 + $0x4] sm:$0xf]
        %v361 = vunpack.c.l.b16 %v259
        %v362 = vunpack.c.l.b16 %v273
        %v363 = vunpack.c.l.b16 %v287
        %v364 = vunpack.c.l.b16 %v301
        %v365 = vunpack.c.l.b16 %v315
        %v366 = vunpack.c.l.b16 %v329
        %v367 = vunpack.c.l.b16 %v343
        %v368 = vunpack.c.l.b16 %v357
        %v369 = vpack.c.b16 %v362, %v361
        %v370 = vpack.c.b16 %v364, %v363
        %v371 = vpack.c.b16 %v366, %v365
        %v372 = vpack.c.b16 %v368, %v367
        %v375 = vunpack.c.l.b16 %v359
        %v376 = vunpack.c.l.b16 %v360
        %v377 = vpack.c.b16 %v376, %v375
        %vm379 = vcmask 130048
        %v381 = vsel %vm379, %v369, 0
        %v384 = vsel %vm379, %v370, 0
        %v387 = vsel %vm379, %v371, 0
        %v390 = vsel %vm379, %v372, 0
        %392 = vmatprep.subr.bf16.mxu0 0
        %393 = vmatpush1.bf16.msra.mxu0 %v377
        %394 = vmatprep.subr.bf16.mxu0 0
        %395 = vmatpush1.bf16.msra.mxu0 0
        %396 = vmatprep.subr.bf16.mxu0 0
        %397 = vmatpush1.bf16.msra.mxu0 0
        %398 = vmatprep.subr.bf16.mxu0 0
        %399 = vmatpush1.bf16.msra.mxu0 0
        %400 = vmatprep.subr.bf16.mxu0 0
        %401 = vmatpush1.bf16.msra.mxu0 0
        %402 = vmatprep.subr.bf16.mxu0 0
        %403 = vmatpush1.bf16.msra.mxu0 0
        %404 = vmatprep.subr.bf16.mxu0 0
        %405 = vmatpush1.bf16.msra.mxu0 0
        %406 = vmatprep.subr.bf16.mxu0 0
        %407 = vmatpush1.bf16.msra.mxu0 0
        %408 = vmatprep.subr.bf16.mxu0 0
        %409 = vmatpush1.bf16.msra.mxu0 0
        %410 = vmatprep.subr.bf16.mxu0 0
        %411 = vmatpush1.bf16.msra.mxu0 0
        %412 = vmatprep.subr.bf16.mxu0 0
        %413 = vmatpush1.bf16.msra.mxu0 0
        %414 = vmatprep.subr.bf16.mxu0 0
        %415 = vmatpush1.bf16.msra.mxu0 0
        %416 = vmatprep.subr.bf16.mxu0 0
        %417 = vmatpush1.bf16.msra.mxu0 0
        %418 = vmatprep.subr.bf16.mxu0 0
        %419 = vmatpush1.bf16.msra.mxu0 0
        %420 = vmatprep.subr.bf16.mxu0 0
        %421 = vmatpush1.bf16.msra.mxu0 0
        %422 = vmatprep.subr.bf16.mxu0 0
        %423 = vmatpush1.bf16.msra.mxu0 0
        %424 = vmatprep.mubr.bf16.mxu0 0
        %425 = vmatmul.mubr.bf16.gmra.mrb[0].mxu0 %v381
        %v426 = vpop.f32.mrb[0].mxu0
        %v427 = vadd.f32 0.0, %v426
        %v428 = vpop.f32.mrb[0].mxu0
        %v429 = vpop.f32.mrb[0].mxu0
        %v430 = vadd.f32 0.0, %v429
        %v431 = vpop.f32.mrb[0].mxu0
        %432 = vmatprep.mubr.bf16.mxu0 0
        %433 = vmatmul.mubr.bf16.gmra.mrb[0].mxu0 %v384
        %v434 = vpop.f32.mrb[0].mxu0
        %v435 = vadd.f32 0.0, %v434
        %v436 = vpop.f32.mrb[0].mxu0
        %v437 = vpop.f32.mrb[0].mxu0
        %v438 = vadd.f32 0.0, %v437
        %v439 = vpop.f32.mrb[0].mxu0
        %440 = vmatprep.mubr.bf16.mxu0 0
        %441 = vmatmul.mubr.bf16.gmra.mrb[0].mxu0 %v387
        %v442 = vpop.f32.mrb[0].mxu0
        %v443 = vadd.f32 0.0, %v442
        %v444 = vpop.f32.mrb[0].mxu0
        %v445 = vpop.f32.mrb[0].mxu0
        %v446 = vadd.f32 0.0, %v445
        %v447 = vpop.f32.mrb[0].mxu0
        %448 = vmatprep.mubr.bf16.mxu0 0
        %449 = vmatmul.mubr.bf16.gmra.mrb[0].mxu0 %v390
        %v450 = vpop.f32.mrb[0].mxu0
        %v451 = vadd.f32 0.0, %v450
        %v452 = vpop.f32.mrb[0].mxu0
        %v453 = vpop.f32.mrb[0].mxu0
        %v454 = vadd.f32 0.0, %v453
        %v455 = vpop.f32.mrb[0].mxu0
        %456 = vdwg.mxu0
        %v465 = vunpack.c.l.b16 %v223
        %v466 = vunpack.c.l.b16 %v225
        %v467 = vunpack.c.l.b16 %v227
        %v468 = vunpack.c.l.b16 %v229
        %v469 = vunpack.c.l.b16 %v231
        %v470 = vunpack.c.l.b16 %v233
        %v471 = vunpack.c.l.b16 %v235
        %v472 = vunpack.c.l.b16 %v237
        %v473 = vpack.c.b16 %v466, %v465
        %v474 = vpack.c.b16 %v468, %v467
        %v475 = vpack.c.b16 %v470, %v469
        %v476 = vpack.c.b16 %v472, %v471
        %v479 = vunpack.c.l.b16 %v241
        %v480 = vunpack.c.l.b16 %v242
        %v481 = vpack.c.b16 %v480, %v479
        %v484 = vsel %vm379, %v473, 0
        %v487 = vsel %vm379, %v474, 0
        %v490 = vsel %vm379, %v475, 0
        %v493 = vsel %vm379, %v476, 0
        %495 = vmatprep.subr.bf16.mxu0 0
        %496 = vmatpush1.bf16.msra.mxu0 %v481
        %497 = vmatprep.subr.bf16.mxu0 0
        %498 = vmatpush1.bf16.msra.mxu0 0
        %499 = vmatprep.subr.bf16.mxu0 0
        %500 = vmatpush1.bf16.msra.mxu0 0
        %501 = vmatprep.subr.bf16.mxu0 0
        %502 = vmatpush1.bf16.msra.mxu0 0
        %503 = vmatprep.subr.bf16.mxu0 0
        %504 = vmatpush1.bf16.msra.mxu0 0
        %505 = vmatprep.subr.bf16.mxu0 0
        %506 = vmatpush1.bf16.msra.mxu0 0
        %507 = vmatprep.subr.bf16.mxu0 0
        %508 = vmatpush1.bf16.msra.mxu0 0
        %509 = vmatprep.subr.bf16.mxu0 0
        %510 = vmatpush1.bf16.msra.mxu0 0
        %511 = vmatprep.subr.bf16.mxu0 0
        %512 = vmatpush1.bf16.msra.mxu0 0
        %513 = vmatprep.subr.bf16.mxu0 0
        %514 = vmatpush1.bf16.msra.mxu0 0
        %515 = vmatprep.subr.bf16.mxu0 0
        %516 = vmatpush1.bf16.msra.mxu0 0
        %517 = vmatprep.subr.bf16.mxu0 0
        %518 = vmatpush1.bf16.msra.mxu0 0
        %519 = vmatprep.subr.bf16.mxu0 0
        %520 = vmatpush1.bf16.msra.mxu0 0
        %521 = vmatprep.subr.bf16.mxu0 0
        %522 = vmatpush1.bf16.msra.mxu0 0
        %523 = vmatprep.subr.bf16.mxu0 0
        %524 = vmatpush1.bf16.msra.mxu0 0
        %525 = vmatprep.subr.bf16.mxu0 0
        %526 = vmatpush1.bf16.msra.mxu0 0
        %527 = vmatprep.mubr.bf16.mxu0 0
        %528 = vmatmul.mubr.bf16.gmra.mrb[0].mxu0 %v484
        %v529 = vpop.f32.mrb[0].mxu0
        %v530 = vadd.f32 %v427, %v529
        %v531 = vpop.f32.mrb[0].mxu0
        %v532 = vpop.f32.mrb[0].mxu0
        %v533 = vadd.f32 %v430, %v532
        %v534 = vpop.f32.mrb[0].mxu0
        %535 = vmatprep.mubr.bf16.mxu0 0
        %536 = vmatmul.mubr.bf16.gmra.mrb[0].mxu0 %v487
        %v537 = vpop.f32.mrb[0].mxu0
        %v538 = vadd.f32 %v435, %v537
        %v539 = vpop.f32.mrb[0].mxu0
        %v540 = vpop.f32.mrb[0].mxu0
        %v541 = vadd.f32 %v438, %v540
        %v542 = vpop.f32.mrb[0].mxu0
        %543 = vmatprep.mubr.bf16.mxu0 0
        %544 = vmatmul.mubr.bf16.gmra.mrb[0].mxu0 %v490
        %v545 = vpop.f32.mrb[0].mxu0
        %v546 = vadd.f32 %v443, %v545
        %v547 = vpop.f32.mrb[0].mxu0
        %v548 = vpop.f32.mrb[0].mxu0
        %v549 = vadd.f32 %v446, %v548
        %v550 = vpop.f32.mrb[0].mxu0
        %551 = vmatprep.mubr.bf16.mxu0 0
        %552 = vmatmul.mubr.bf16.gmra.mrb[0].mxu0 %v493
        %v553 = vpop.f32.mrb[0].mxu0
        %v554 = vadd.f32 %v451, %v553
        %v555 = vpop.f32.mrb[0].mxu0
        %v556 = vpop.f32.mrb[0].mxu0
        %v557 = vadd.f32 %v454, %v556
        %v558 = vpop.f32.mrb[0].mxu0
        %559 = vdwg.mxu0
        %s560 = scalar_lea.vmem %s1, 16
        %v561 = vld [vmem:[%s560] sm:$0xf]
        %v562 = vld [vmem:[%s560 + $0x4] sm:$0xf]
        %v564 = vunpack.c.l.b16 %v239
        %v565 = vpack.c.b16 %v467, %v466
        %v566 = vpack.c.b16 %v469, %v468
        %v567 = vpack.c.b16 %v471, %v470
        %v568 = vpack.c.b16 %v564, %v472
        %v571 = vunpack.c.l.b16 %v561
        %v572 = vunpack.c.l.b16 %v562
        %v573 = vpack.c.b16 %v572, %v571
        %v576 = vsel %vm379, %v565, 0
        %v579 = vsel %vm379, %v566, 0
        %v582 = vsel %vm379, %v567, 0
        %v585 = vsel %vm379, %v568, 0
        %587 = vmatprep.subr.bf16.mxu0 0
        %588 = vmatpush1.bf16.msra.mxu0 %v573
        %589 = vmatprep.subr.bf16.mxu0 0
        %590 = vmatpush1.bf16.msra.mxu0 0
        %591 = vmatprep.subr.bf16.mxu0 0
        %592 = vmatpush1.bf16.msra.mxu0 0
        %593 = vmatprep.subr.bf16.mxu0 0
        %594 = vmatpush1.bf16.msra.mxu0 0
        %595 = vmatprep.subr.bf16.mxu0 0
        %596 = vmatpush1.bf16.msra.mxu0 0
        %597 = vmatprep.subr.bf16.mxu0 0
        %598 = vmatpush1.bf16.msra.mxu0 0
        %599 = vmatprep.subr.bf16.mxu0 0
        %600 = vmatpush1.bf16.msra.mxu0 0
        %601 = vmatprep.subr.bf16.mxu0 0
        %602 = vmatpush1.bf16.msra.mxu0 0
        %603 = vmatprep.subr.bf16.mxu0 0
        %604 = vmatpush1.bf16.msra.mxu0 0
        %605 = vmatprep.subr.bf16.mxu0 0
        %606 = vmatpush1.bf16.msra.mxu0 0
        %607 = vmatprep.subr.bf16.mxu0 0
        %608 = vmatpush1.bf16.msra.mxu0 0
        %609 = vmatprep.subr.bf16.mxu0 0
        %610 = vmatpush1.bf16.msra.mxu0 0
        %611 = vmatprep.subr.bf16.mxu0 0
        %612 = vmatpush1.bf16.msra.mxu0 0
        %613 = vmatprep.subr.bf16.mxu0 0
        %614 = vmatpush1.bf16.msra.mxu0 0
        %615 = vmatprep.subr.bf16.mxu0 0
        %616 = vmatpush1.bf16.msra.mxu0 0
        %617 = vmatprep.subr.bf16.mxu0 0
        %618 = vmatpush1.bf16.msra.mxu0 0
        %619 = vmatprep.mubr.bf16.mxu0 0
        %620 = vmatmul.mubr.bf16.gmra.mrb[0].mxu0 %v576
        %v621 = vpop.f32.mrb[0].mxu0
        %v622 = vadd.f32 0.0, %v621
        %v623 = vpop.f32.mrb[0].mxu0
        %v624 = vpop.f32.mrb[0].mxu0
        %v625 = vadd.f32 0.0, %v624
        %v626 = vpop.f32.mrb[0].mxu0
        %627 = vmatprep.mubr.bf16.mxu0 0
        %628 = vmatmul.mubr.bf16.gmra.mrb[0].mxu0 %v579
        %v629 = vpop.f32.mrb[0].mxu0
        %v630 = vadd.f32 0.0, %v629
        %v631 = vpop.f32.mrb[0].mxu0
        %v632 = vpop.f32.mrb[0].mxu0
        %v633 = vadd.f32 0.0, %v632
        %v634 = vpop.f32.mrb[0].mxu0
        %635 = vmatprep.mubr.bf16.mxu0 0
        %636 = vmatmul.mubr.bf16.gmra.mrb[0].mxu0 %v582
        %v637 = vpop.f32.mrb[0].mxu0
        %v638 = vadd.f32 0.0, %v637
        %v639 = vpop.f32.mrb[0].mxu0
        %v640 = vpop.f32.mrb[0].mxu0
        %v641 = vadd.f32 0.0, %v640
        %v642 = vpop.f32.mrb[0].mxu0
        %643 = vmatprep.mubr.bf16.mxu0 0
        %644 = vmatmul.mubr.bf16.gmra.mrb[0].mxu0 %v585
        %v645 = vpop.f32.mrb[0].mxu0
        %v646 = vadd.f32 0.0, %v645
        %v647 = vpop.f32.mrb[0].mxu0
        %v648 = vpop.f32.mrb[0].mxu0
        %v649 = vadd.f32 0.0, %v648
        %v650 = vpop.f32.mrb[0].mxu0
        %651 = vdwg.mxu0
        %v652 = vadd.f32 %v530, %v622
        %v653 = vadd.f32 %v533, %v625
        %v654 = vadd.f32 %v538, %v630
        %v655 = vadd.f32 %v541, %v633
        %v656 = vadd.f32 %v546, %v638
        %v657 = vadd.f32 %v549, %v641
        %v658 = vadd.f32 %v554, %v646
        %v659 = vadd.f32 %v557, %v649
        %v661 = vshrl.u32 %v239, 16
        %v663 = vrot.slane %v661, 4
        %v664 = vshll.u32 %v239, 16
        %v666 = vrot.slane %v664, 5
        %v667 = vor.u32 %v663, %v666
        %v668 = vrot.slane %v667, 4
        %v670 = vshll.u32 %v240, 16
        %v672 = vrot.slane %v670, 5
        %v673 = vsel %vm245, %v668, %v672
        %s674 = scalar_lea.vmem %s1, 24
        %v675 = vld [vmem:[%s674] sm:$0xf]
        %v676 = vld [vmem:[%s674 + $0x4] sm:$0xf]
        %v677 = vunpack.c.l.b16 %v673
        %v678 = vpack.c.b16 %v363, %v362
        %v679 = vpack.c.b16 %v365, %v364
        %v680 = vpack.c.b16 %v367, %v366
        %v681 = vpack.c.b16 %v677, %v368
        %v684 = vunpack.c.l.b16 %v675
        %v685 = vunpack.c.l.b16 %v676
        %v686 = vpack.c.b16 %v685, %v684
        %v689 = vsel %vm379, %v678, 0
        %v692 = vsel %vm379, %v679, 0
        %v695 = vsel %vm379, %v680, 0
        %v698 = vsel %vm379, %v681, 0
        %700 = vmatprep.subr.bf16.mxu0 0
        %701 = vmatpush1.bf16.msra.mxu0 %v686
        %702 = vmatprep.subr.bf16.mxu0 0
        %703 = vmatpush1.bf16.msra.mxu0 0
        %704 = vmatprep.subr.bf16.mxu0 0
        %705 = vmatpush1.bf16.msra.mxu0 0
        %706 = vmatprep.subr.bf16.mxu0 0
        %707 = vmatpush1.bf16.msra.mxu0 0
        %708 = vmatprep.subr.bf16.mxu0 0
        %709 = vmatpush1.bf16.msra.mxu0 0
        %710 = vmatprep.subr.bf16.mxu0 0
        %711 = vmatpush1.bf16.msra.mxu0 0
        %712 = vmatprep.subr.bf16.mxu0 0
        %713 = vmatpush1.bf16.msra.mxu0 0
        %714 = vmatprep.subr.bf16.mxu0 0
        %715 = vmatpush1.bf16.msra.mxu0 0
        %716 = vmatprep.subr.bf16.mxu0 0
        %717 = vmatpush1.bf16.msra.mxu0 0
        %718 = vmatprep.subr.bf16.mxu0 0
        %719 = vmatpush1.bf16.msra.mxu0 0
        %720 = vmatprep.subr.bf16.mxu0 0
        %721 = vmatpush1.bf16.msra.mxu0 0
        %722 = vmatprep.subr.bf16.mxu0 0
        %723 = vmatpush1.bf16.msra.mxu0 0
        %724 = vmatprep.subr.bf16.mxu0 0
        %725 = vmatpush1.bf16.msra.mxu0 0
        %726 = vmatprep.subr.bf16.mxu0 0
        %727 = vmatpush1.bf16.msra.mxu0 0
        %728 = vmatprep.subr.bf16.mxu0 0
        %729 = vmatpush1.bf16.msra.mxu0 0
        %730 = vmatprep.subr.bf16.mxu0 0
        %731 = vmatpush1.bf16.msra.mxu0 0
        %732 = vmatprep.mubr.bf16.mxu0 0
        %733 = vmatmul.mubr.bf16.gmra.mrb[0].mxu0 %v689
        %v734 = vpop.f32.mrb[0].mxu0
        %v735 = vadd.f32 0.0, %v734
        %v736 = vpop.f32.mrb[0].mxu0
        %v737 = vpop.f32.mrb[0].mxu0
        %v738 = vadd.f32 0.0, %v737
        %v739 = vpop.f32.mrb[0].mxu0
        %740 = vmatprep.mubr.bf16.mxu0 0
        %741 = vmatmul.mubr.bf16.gmra.mrb[0].mxu0 %v692
        %v742 = vpop.f32.mrb[0].mxu0
        %v743 = vadd.f32 0.0, %v742
        %v744 = vpop.f32.mrb[0].mxu0
        %v745 = vpop.f32.mrb[0].mxu0
        %v746 = vadd.f32 0.0, %v745
        %v747 = vpop.f32.mrb[0].mxu0
        %748 = vmatprep.mubr.bf16.mxu0 0
        %749 = vmatmul.mubr.bf16.gmra.mrb[0].mxu0 %v695
        %v750 = vpop.f32.mrb[0].mxu0
        %v751 = vadd.f32 0.0, %v750
        %v752 = vpop.f32.mrb[0].mxu0
        %v753 = vpop.f32.mrb[0].mxu0
        %v754 = vadd.f32 0.0, %v753
        %v755 = vpop.f32.mrb[0].mxu0
        %756 = vmatprep.mubr.bf16.mxu0 0
        %757 = vmatmul.mubr.bf16.gmra.mrb[0].mxu0 %v698
        %v758 = vpop.f32.mrb[0].mxu0
        %v759 = vadd.f32 0.0, %v758
        %v760 = vpop.f32.mrb[0].mxu0
        %v761 = vpop.f32.mrb[0].mxu0
        %v762 = vadd.f32 0.0, %v761
        %v763 = vpop.f32.mrb[0].mxu0
        %764 = vdwg.mxu0
        %v765 = vadd.f32 %v652, %v735
        %v766 = vadd.f32 %v653, %v738
        %v767 = vadd.f32 %v654, %v743
        %v768 = vadd.f32 %v655, %v746
        %v769 = vadd.f32 %v656, %v751
        %v770 = vadd.f32 %v657, %v754
        %v771 = vadd.f32 %v658, %v759
        %v772 = vadd.f32 %v659, %v762
        %v773 = vld [vmem:[%s4] sm:$0x1]
        %v774 = vlaneseq
        %v775 = vshrl.u32 %v774, 7
        %v776 = vsub.s32 0, %v775
        %v777 = vrot.slane %v773, %v776
        %v778 = vadd.f32 %v765, %v777
        %v779 = vadd.f32 %v766, %v777
        %v780 = vadd.f32 %v767, %v777
        %v781 = vadd.f32 %v768, %v777
        %v782 = vadd.f32 %v769, %v777
        %v783 = vadd.f32 %v770, %v777
        %v784 = vadd.f32 %v771, %v777
        %v785 = vadd.f32 %v772, %v777
        %v786 = vsub.f32 0.0, %v778
        %v787 = vsub.f32 0.0, %v779
        %v788 = vsub.f32 0.0, %v780
        %v789 = vsub.f32 0.0, %v781
        %v790 = vsub.f32 0.0, %v782
        %v791 = vsub.f32 0.0, %v783
        %v792 = vsub.f32 0.0, %v784
        %v793 = vsub.f32 0.0, %v785
        %v794 = vmul.f32 %v786, 1.442695
        %v795 = vpow.pop %v794
        %v796 = vmul.f32 %v787, 1.442695
        %v797 = vpow.pop %v796
        %v798 = vmul.f32 %v788, 1.442695
        %v799 = vpow.pop %v798
        %v800 = vmul.f32 %v789, 1.442695
        %v801 = vpow.pop %v800
        %v802 = vmul.f32 %v790, 1.442695
        %v803 = vpow.pop %v802
        %v804 = vmul.f32 %v791, 1.442695
        %v805 = vpow.pop %v804
        %v806 = vmul.f32 %v792, 1.442695
        %v807 = vpow.pop %v806
        %v808 = vmul.f32 %v793, 1.442695
        %v809 = vpow.pop %v808
        %v810 = vadd.f32 %v795, 1.0
        %v811 = vadd.f32 %v797, 1.0
        %v812 = vadd.f32 %v799, 1.0
        %v813 = vadd.f32 %v801, 1.0
        %v814 = vadd.f32 %v803, 1.0
        %v815 = vadd.f32 %v805, 1.0
        %v816 = vadd.f32 %v807, 1.0
        %v817 = vadd.f32 %v809, 1.0
        %v818 = vrcp.pop %v810
        %v819 = vrcp.pop %v811
        %v820 = vrcp.pop %v812
        %v821 = vrcp.pop %v813
        %v822 = vrcp.pop %v814
        %v823 = vrcp.pop %v815
        %v824 = vrcp.pop %v816
        %v825 = vrcp.pop %v817
        %v826 = vmul.f32 %v778, %v818
        %v827 = vmul.f32 %v779, %v819
        %v828 = vmul.f32 %v780, %v820
        %v829 = vmul.f32 %v781, %v821
        %v830 = vmul.f32 %v782, %v822
        %v831 = vmul.f32 %v783, %v823
        %v832 = vmul.f32 %v784, %v824
        %v833 = vmul.f32 %v785, %v825
        %v834 = vpack.c.bf16 %v827, %v826
        %v835 = vpack.c.bf16 %v829, %v828
        %v836 = vpack.c.bf16 %v831, %v830
        %v837 = vpack.c.bf16 %v833, %v832
        %v838 = vld [vmem:[%s3] sm:$0xf]
        %v839 = vld [vmem:[%s3 + $0x4] sm:$0xf]
        %v840 = vld [vmem:[%s3 + $0x8] sm:$0xf]
        %v841 = vld [vmem:[%s3 + $0xc] sm:$0xf]
        %v842 = vld [vmem:[%s3 + $0x10] sm:$0xf]
        %v843 = vld [vmem:[%s3 + $0x14] sm:$0xf]
        %v844 = vld [vmem:[%s3 + $0x18] sm:$0xf]
        %v845 = vld [vmem:[%s3 + $0x1c] sm:$0xf]
        %v846 = vld [vmem:[%s3 + $0x20] sm:$0xf]
        %v847 = vld [vmem:[%s3 + $0x24] sm:$0xf]
        %v848 = vld [vmem:[%s3 + $0x28] sm:$0xf]
        %v849 = vld [vmem:[%s3 + $0x2c] sm:$0xf]
        %v850 = vld [vmem:[%s3 + $0x30] sm:$0xf]
        %v851 = vld [vmem:[%s3 + $0x34] sm:$0xf]
        %v852 = vld [vmem:[%s3 + $0x38] sm:$0xf]
        %v853 = vld [vmem:[%s3 + $0x3c] sm:$0xf]
        %v854 = vld [vmem:[%s4 + $0x1] sm:$0x1]
        %v855 = vlaneseq
        %v856 = vshrl.u32 %v855, 7
        %v857 = vsub.s32 0, %v856
        %v858 = vrot.slane %v854, %v857
        %v875 = vunpack.c.l.b16 %v838
        %v876 = vunpack.c.l.b16 %v839
        %v877 = vunpack.c.l.b16 %v840
        %v878 = vunpack.c.l.b16 %v841
        %v879 = vunpack.c.l.b16 %v842
        %v880 = vunpack.c.l.b16 %v843
        %v881 = vunpack.c.l.b16 %v844
        %v882 = vunpack.c.l.b16 %v845
        %v883 = vunpack.c.l.b16 %v846
        %v884 = vunpack.c.l.b16 %v847
        %v885 = vunpack.c.l.b16 %v848
        %v886 = vunpack.c.l.b16 %v849
        %v887 = vunpack.c.l.b16 %v850
        %v888 = vunpack.c.l.b16 %v851
        %v889 = vunpack.c.l.b16 %v852
        %v890 = vunpack.c.l.b16 %v853
        %v891 = vpack.c.b16 %v876, %v875
        %v892 = vpack.c.b16 %v878, %v877
        %v893 = vpack.c.b16 %v880, %v879
        %v894 = vpack.c.b16 %v882, %v881
        %v895 = vpack.c.b16 %v884, %v883
        %v896 = vpack.c.b16 %v886, %v885
        %v897 = vpack.c.b16 %v888, %v887
        %v898 = vpack.c.b16 %v890, %v889
        %907 = vmatprep.subr.bf16.mxu0 0
        %908 = vmatpush1.bf16.msra.mxu0 %v891
        %909 = vmatprep.subr.bf16.mxu0 0
        %910 = vmatpush1.bf16.msra.mxu0 %v892
        %911 = vmatprep.subr.bf16.mxu0 0
        %912 = vmatpush1.bf16.msra.mxu0 %v893
        %913 = vmatprep.subr.bf16.mxu0 0
        %914 = vmatpush1.bf16.msra.mxu0 %v894
        %915 = vmatprep.subr.bf16.mxu0 0
        %916 = vmatpush1.bf16.msra.mxu0 %v895
        %917 = vmatprep.subr.bf16.mxu0 0
        %918 = vmatpush1.bf16.msra.mxu0 %v896
        %919 = vmatprep.subr.bf16.mxu0 0
        %920 = vmatpush1.bf16.msra.mxu0 %v897
        %921 = vmatprep.subr.bf16.mxu0 0
        %922 = vmatpush1.bf16.msra.mxu0 %v898
        %923 = vmatprep.subr.bf16.mxu0 0
        %924 = vmatpush1.bf16.msra.mxu0 0
        %925 = vmatprep.subr.bf16.mxu0 0
        %926 = vmatpush1.bf16.msra.mxu0 0
        %927 = vmatprep.subr.bf16.mxu0 0
        %928 = vmatpush1.bf16.msra.mxu0 0
        %929 = vmatprep.subr.bf16.mxu0 0
        %930 = vmatpush1.bf16.msra.mxu0 0
        %931 = vmatprep.subr.bf16.mxu0 0
        %932 = vmatpush1.bf16.msra.mxu0 0
        %933 = vmatprep.subr.bf16.mxu0 0
        %934 = vmatpush1.bf16.msra.mxu0 0
        %935 = vmatprep.subr.bf16.mxu0 0
        %936 = vmatpush1.bf16.msra.mxu0 0
        %937 = vmatprep.subr.bf16.mxu0 0
        %938 = vmatpush1.bf16.msra.mxu0 0
        %939 = vmatprep.mubr.bf16.mxu0 0
        %940 = vmatmul.mubr.bf16.gmra.mrb[0].mxu0 %v834
        %v941 = vpop.f32.mrb[0].mxu0
        %v942 = vadd.f32 %v858, %v941
        %v943 = vpop.f32.mrb[0].mxu0
        %v944 = vpop.f32.mrb[0].mxu0
        %v945 = vadd.f32 %v858, %v944
        %v946 = vpop.f32.mrb[0].mxu0
        %947 = vmatprep.mubr.bf16.mxu0 0
        %948 = vmatmul.mubr.bf16.gmra.mrb[0].mxu0 %v835
        %v949 = vpop.f32.mrb[0].mxu0
        %v950 = vadd.f32 %v858, %v949
        %v951 = vpop.f32.mrb[0].mxu0
        %v952 = vpop.f32.mrb[0].mxu0
        %v953 = vadd.f32 %v858, %v952
        %v954 = vpop.f32.mrb[0].mxu0
        %955 = vmatprep.mubr.bf16.mxu0 0
        %956 = vmatmul.mubr.bf16.gmra.mrb[0].mxu0 %v836
        %v957 = vpop.f32.mrb[0].mxu0
        %v958 = vadd.f32 %v858, %v957
        %v959 = vpop.f32.mrb[0].mxu0
        %v960 = vpop.f32.mrb[0].mxu0
        %v961 = vadd.f32 %v858, %v960
        %v962 = vpop.f32.mrb[0].mxu0
        %963 = vmatprep.mubr.bf16.mxu0 0
        %964 = vmatmul.mubr.bf16.gmra.mrb[0].mxu0 %v837
        %v965 = vpop.f32.mrb[0].mxu0
        %v966 = vadd.f32 %v858, %v965
        %v967 = vpop.f32.mrb[0].mxu0
        %v968 = vpop.f32.mrb[0].mxu0
        %v969 = vadd.f32 %v858, %v968
        %v970 = vpop.f32.mrb[0].mxu0
        %971 = vdwg.mxu0
        %v972 = vsub.f32 0.0, %v942
        %v973 = vsub.f32 0.0, %v945
        %v974 = vsub.f32 0.0, %v950
        %v975 = vsub.f32 0.0, %v953
        %v976 = vsub.f32 0.0, %v958
        %v977 = vsub.f32 0.0, %v961
        %v978 = vsub.f32 0.0, %v966
        %v979 = vsub.f32 0.0, %v969
        %v980 = vmul.f32 %v972, 1.442695
        %v981 = vpow.pop %v980
        %v982 = vmul.f32 %v973, 1.442695
        %v983 = vpow.pop %v982
        %v984 = vmul.f32 %v974, 1.442695
        %v985 = vpow.pop %v984
        %v986 = vmul.f32 %v975, 1.442695
        %v987 = vpow.pop %v986
        %v988 = vmul.f32 %v976, 1.442695
        %v989 = vpow.pop %v988
        %v990 = vmul.f32 %v977, 1.442695
        %v991 = vpow.pop %v990
        %v992 = vmul.f32 %v978, 1.442695
        %v993 = vpow.pop %v992
        %v994 = vmul.f32 %v979, 1.442695
        %v995 = vpow.pop %v994
        %v996 = vadd.f32 %v981, 1.0
        %v997 = vadd.f32 %v983, 1.0
        %v998 = vadd.f32 %v985, 1.0
        %v999 = vadd.f32 %v987, 1.0
        %v1000 = vadd.f32 %v989, 1.0
        %v1001 = vadd.f32 %v991, 1.0
        %v1002 = vadd.f32 %v993, 1.0
        %v1003 = vadd.f32 %v995, 1.0
        %v1004 = vrcp.pop %v996
        %v1005 = vrcp.pop %v997
        %v1006 = vrcp.pop %v998
        %v1007 = vrcp.pop %v999
        %v1008 = vrcp.pop %v1000
        %v1009 = vrcp.pop %v1001
        %v1010 = vrcp.pop %v1002
        %v1011 = vrcp.pop %v1003
        %v1012 = vmul.f32 %v942, %v1004
        %v1013 = vmul.f32 %v945, %v1005
        %v1014 = vmul.f32 %v950, %v1006
        %v1015 = vmul.f32 %v953, %v1007
        %v1016 = vmul.f32 %v958, %v1008
        %v1017 = vmul.f32 %v961, %v1009
        %v1018 = vmul.f32 %v966, %v1010
        %v1019 = vmul.f32 %v969, %v1011
        %1020 = vst [vmem:[#allocation2] sm:$0xff] 0.0
        %1021 = vst [vmem:[#allocation2 + $0x8] sm:$0x3] 0.0
        %1022 = vst [vmem:[#allocation2 + $0x10] sm:$0xff] 0.0
        %1023 = vst [vmem:[#allocation2 + $0x18] sm:$0x3] 0.0
        %1024 = vst [vmem:[#allocation2 + $0x20] sm:$0xff] 0.0
        %1025 = vst [vmem:[#allocation2 + $0x28] sm:$0x3] 0.0
        %1026 = vst [vmem:[#allocation2 + $0x30] sm:$0xff] 0.0
        %1027 = vst [vmem:[#allocation2 + $0x38] sm:$0x3] 0.0
        %1028 = vst [vmem:[#allocation2 + $0x40] sm:$0xff] 0.0
        %1029 = vst [vmem:[#allocation2 + $0x48] sm:$0x3] 0.0
        %1030 = vst [vmem:[#allocation2 + $0x50] sm:$0xff] 0.0
        %1031 = vst [vmem:[#allocation2 + $0x58] sm:$0x3] 0.0
        %1032 = vst [vmem:[#allocation2 + $0x60] sm:$0xff] 0.0
        %1033 = vst [vmem:[#allocation2 + $0x68] sm:$0x3] 0.0
        %1034 = vst [vmem:[#allocation2 + $0x70] sm:$0xff] 0.0
        %1035 = vst [vmem:[#allocation2 + $0x78] sm:$0x3] 0.0
        %1036 = vst [vmem:[#allocation2 + $0x80] sm:$0xff] 0.0
        %1037 = vst [vmem:[#allocation2 + $0x88] sm:$0x3] 0.0
        %1038 = vst [vmem:[#allocation2 + $0x90] sm:$0xff] 0.0
        %1039 = vst [vmem:[#allocation2 + $0x98] sm:$0x3] 0.0
        %s1040 = scalar_lea.vmem [#allocation2], 16
        %1041 = vst [vmem:[%s1040 + $0x1] sm:$0xff] %v1012
        %1042 = vst [vmem:[%s1040 + $0x11] sm:$0xff] %v1013
        %1043 = vst [vmem:[%s1040 + $0x21] sm:$0xff] %v1014
        %1044 = vst [vmem:[%s1040 + $0x31] sm:$0xff] %v1015
        %1045 = vst [vmem:[%s1040 + $0x41] sm:$0xff] %v1016
        %1046 = vst [vmem:[%s1040 + $0x51] sm:$0xff] %v1017
        %1047 = vst [vmem:[%s1040 + $0x61] sm:$0xff] %v1018
        %1048 = vst [vmem:[%s1040 + $0x71] sm:$0xff] %v1019
        %v1049 = vld [vmem:[#allocation2] sm:$0xff]
        %v1050 = vld [vmem:[#allocation2 + $0x10] sm:$0xff]
        %v1051 = vld [vmem:[#allocation2 + $0x20] sm:$0xff]
        %v1052 = vld [vmem:[#allocation2 + $0x30] sm:$0xff]
        %v1053 = vld [vmem:[#allocation2 + $0x40] sm:$0xff]
        %v1054 = vld [vmem:[#allocation2 + $0x50] sm:$0xff]
        %v1055 = vld [vmem:[#allocation2 + $0x60] sm:$0xff]
        %v1056 = vld [vmem:[#allocation2 + $0x70] sm:$0xff]
        %v1057 = vld [vmem:[%s2] sm:$0x1]
        %v1058 = vlaneseq
        %v1059 = vshrl.u32 %v1058, 7
        %v1060 = vsub.s32 0, %v1059
        %v1061 = vrot.slane %v1057, %v1060
        %v1062 = vmul.f32 %v1049, %v1061
        %v1063 = vmul.f32 %v1050, %v1061
        %v1064 = vmul.f32 %v1051, %v1061
        %v1065 = vmul.f32 %v1052, %v1061
        %v1066 = vmul.f32 %v1053, %v1061
        %v1067 = vmul.f32 %v1054, %v1061
        %v1068 = vmul.f32 %v1055, %v1061
        %v1069 = vmul.f32 %v1056, %v1061
        %v1070 = vadd.f32 %v1062, 0.0
        %v1071 = vadd.f32 %v1063, 0.0
        %v1072 = vadd.f32 %v1064, 0.0
        %v1073 = vadd.f32 %v1065, 0.0
        %v1074 = vadd.f32 %v1066, 0.0
        %v1075 = vadd.f32 %v1067, 0.0
        %v1076 = vadd.f32 %v1068, 0.0
        %v1077 = vadd.f32 %v1069, 0.0
        %v1078 = vld [vmem:[#allocation2 + $0x1] sm:$0xff]
        %v1079 = vld [vmem:[#allocation2 + $0x11] sm:$0xff]
        %v1080 = vld [vmem:[#allocation2 + $0x21] sm:$0xff]
        %v1081 = vld [vmem:[#allocation2 + $0x31] sm:$0xff]
        %v1082 = vld [vmem:[#allocation2 + $0x41] sm:$0xff]
        %v1083 = vld [vmem:[#allocation2 + $0x51] sm:$0xff]
        %v1084 = vld [vmem:[#allocation2 + $0x61] sm:$0xff]
        %v1085 = vld [vmem:[#allocation2 + $0x71] sm:$0xff]
        %v1086 = vld [vmem:[%s2 + $0x1] sm:$0x1]
        %v1087 = vlaneseq
        %v1088 = vshrl.u32 %v1087, 7
        %v1089 = vsub.s32 0, %v1088
        %v1090 = vrot.slane %v1086, %v1089
        %v1091 = vmul.f32 %v1078, %v1090
        %v1092 = vmul.f32 %v1079, %v1090
        %v1093 = vmul.f32 %v1080, %v1090
        %v1094 = vmul.f32 %v1081, %v1090
        %v1095 = vmul.f32 %v1082, %v1090
        %v1096 = vmul.f32 %v1083, %v1090
        %v1097 = vmul.f32 %v1084, %v1090
        %v1098 = vmul.f32 %v1085, %v1090
        %v1099 = vadd.f32 %v1070, %v1091
        %v1100 = vadd.f32 %v1071, %v1092
        %v1101 = vadd.f32 %v1072, %v1093
        %v1102 = vadd.f32 %v1073, %v1094
        %v1103 = vadd.f32 %v1074, %v1095
        %v1104 = vadd.f32 %v1075, %v1096
        %v1105 = vadd.f32 %v1076, %v1097
        %v1106 = vadd.f32 %v1077, %v1098
        %v1107 = vld [vmem:[#allocation2 + $0x2] sm:$0xff]
        %v1108 = vld [vmem:[#allocation2 + $0x12] sm:$0xff]
        %v1109 = vld [vmem:[#allocation2 + $0x22] sm:$0xff]
        %v1110 = vld [vmem:[#allocation2 + $0x32] sm:$0xff]
        %v1111 = vld [vmem:[#allocation2 + $0x42] sm:$0xff]
        %v1112 = vld [vmem:[#allocation2 + $0x52] sm:$0xff]
        %v1113 = vld [vmem:[#allocation2 + $0x62] sm:$0xff]
        %v1114 = vld [vmem:[#allocation2 + $0x72] sm:$0xff]
        %v1115 = vld [vmem:[%s2 + $0x2] sm:$0x1]
        %v1116 = vlaneseq
        %v1117 = vshrl.u32 %v1116, 7
        %v1118 = vsub.s32 0, %v1117
        %v1119 = vrot.slane %v1115, %v1118
        %v1120 = vmul.f32 %v1107, %v1119
        %v1121 = vmul.f32 %v1108, %v1119
        %v1122 = vmul.f32 %v1109, %v1119
        %v1123 = vmul.f32 %v1110, %v1119
        %v1124 = vmul.f32 %v1111, %v1119
        %v1125 = vmul.f32 %v1112, %v1119
        %v1126 = vmul.f32 %v1113, %v1119
        %v1127 = vmul.f32 %v1114, %v1119
        %v1128 = vadd.f32 %v1099, %v1120
        %v1129 = vadd.f32 %v1100, %v1121
        %v1130 = vadd.f32 %v1101, %v1122
        %v1131 = vadd.f32 %v1102, %v1123
        %v1132 = vadd.f32 %v1103, %v1124
        %v1133 = vadd.f32 %v1104, %v1125
        %v1134 = vadd.f32 %v1105, %v1126
        %v1135 = vadd.f32 %v1106, %v1127
        %v1136 = vld [vmem:[%s1040] sm:$0xff]
        %v1137 = vld [vmem:[%s1040 + $0x10] sm:$0xff]
        %v1138 = vld [vmem:[%s1040 + $0x20] sm:$0xff]
        %v1139 = vld [vmem:[%s1040 + $0x30] sm:$0xff]
        %v1140 = vld [vmem:[%s1040 + $0x40] sm:$0xff]
        %v1141 = vld [vmem:[%s1040 + $0x50] sm:$0xff]
        %v1142 = vld [vmem:[%s1040 + $0x60] sm:$0xff]
        %v1143 = vld [vmem:[%s1040 + $0x70] sm:$0xff]
        %v1144 = vld [vmem:[%s2 + $0x3] sm:$0x1]
        %v1145 = vlaneseq
        %v1146 = vshrl.u32 %v1145, 7
        %v1147 = vsub.s32 0, %v1146
        %v1148 = vrot.slane %v1144, %v1147
        %v1149 = vmul.f32 %v1136, %v1148
        %v1150 = vmul.f32 %v1137, %v1148
        %v1151 = vmul.f32 %v1138, %v1148
        %v1152 = vmul.f32 %v1139, %v1148
        %v1153 = vmul.f32 %v1140, %v1148
        %v1154 = vmul.f32 %v1141, %v1148
        %v1155 = vmul.f32 %v1142, %v1148
        %v1156 = vmul.f32 %v1143, %v1148
        %v1157 = vadd.f32 %v1128, %v1149
        %v1158 = vadd.f32 %v1129, %v1150
        %v1159 = vadd.f32 %v1130, %v1151
        %v1160 = vadd.f32 %v1131, %v1152
        %v1161 = vadd.f32 %v1132, %v1153
        %v1162 = vadd.f32 %v1133, %v1154
        %v1163 = vadd.f32 %v1134, %v1155
        %v1164 = vadd.f32 %v1135, %v1156
        %v1165 = vld [vmem:[%s1040 + $0x1] sm:$0xff]
        %v1166 = vld [vmem:[%s1040 + $0x11] sm:$0xff]
        %v1167 = vld [vmem:[%s1040 + $0x21] sm:$0xff]
        %v1168 = vld [vmem:[%s1040 + $0x31] sm:$0xff]
        %v1169 = vld [vmem:[%s1040 + $0x41] sm:$0xff]
        %v1170 = vld [vmem:[%s1040 + $0x51] sm:$0xff]
        %v1171 = vld [vmem:[%s1040 + $0x61] sm:$0xff]
        %v1172 = vld [vmem:[%s1040 + $0x71] sm:$0xff]
        %v1173 = vld [vmem:[%s2 + $0x4] sm:$0x1]
        %v1174 = vlaneseq
        %v1175 = vshrl.u32 %v1174, 7
        %v1176 = vsub.s32 0, %v1175
        %v1177 = vrot.slane %v1173, %v1176
        %v1178 = vmul.f32 %v1165, %v1177
        %v1179 = vmul.f32 %v1166, %v1177
        %v1180 = vmul.f32 %v1167, %v1177
        %v1181 = vmul.f32 %v1168, %v1177
        %v1182 = vmul.f32 %v1169, %v1177
        %v1183 = vmul.f32 %v1170, %v1177
        %v1184 = vmul.f32 %v1171, %v1177
        %v1185 = vmul.f32 %v1172, %v1177
        %v1186 = vadd.f32 %v1157, %v1178
        %v1187 = vadd.f32 %v1158, %v1179
        %v1188 = vadd.f32 %v1159, %v1180
        %v1189 = vadd.f32 %v1160, %v1181
        %v1190 = vadd.f32 %v1161, %v1182
        %v1191 = vadd.f32 %v1162, %v1183
        %v1192 = vadd.f32 %v1163, %v1184
        %v1193 = vadd.f32 %v1164, %v1185
        %v1194 = vld [vmem:[%s1040 + $0x2] sm:$0xff]
        %v1195 = vld [vmem:[%s1040 + $0x12] sm:$0xff]
        %v1196 = vld [vmem:[%s1040 + $0x22] sm:$0xff]
        %v1197 = vld [vmem:[%s1040 + $0x32] sm:$0xff]
        %v1198 = vld [vmem:[%s1040 + $0x42] sm:$0xff]
        %v1199 = vld [vmem:[%s1040 + $0x52] sm:$0xff]
        %v1200 = vld [vmem:[%s1040 + $0x62] sm:$0xff]
        %v1201 = vld [vmem:[%s1040 + $0x72] sm:$0xff]
        %v1202 = vld [vmem:[%s2 + $0x5] sm:$0x1]
        %v1203 = vlaneseq
        %v1204 = vshrl.u32 %v1203, 7
        %v1205 = vsub.s32 0, %v1204
        %v1206 = vrot.slane %v1202, %v1205
        %v1207 = vmul.f32 %v1194, %v1206
        %v1208 = vmul.f32 %v1195, %v1206
        %v1209 = vmul.f32 %v1196, %v1206
        %v1210 = vmul.f32 %v1197, %v1206
        %v1211 = vmul.f32 %v1198, %v1206
        %v1212 = vmul.f32 %v1199, %v1206
        %v1213 = vmul.f32 %v1200, %v1206
        %v1214 = vmul.f32 %v1201, %v1206
        %v1215 = vadd.f32 %v1186, %v1207
        %v1216 = vadd.f32 %v1187, %v1208
        %v1217 = vadd.f32 %v1188, %v1209
        %v1218 = vadd.f32 %v1189, %v1210
        %v1219 = vadd.f32 %v1190, %v1211
        %v1220 = vadd.f32 %v1191, %v1212
        %v1221 = vadd.f32 %v1192, %v1213
        %v1222 = vadd.f32 %v1193, %v1214
        %s1223 = scalar_lea.vmem [#allocation2], 32
        %v1224 = vld [vmem:[%s1223] sm:$0xff]
        %v1225 = vld [vmem:[%s1223 + $0x10] sm:$0xff]
        %v1226 = vld [vmem:[%s1223 + $0x20] sm:$0xff]
        %v1227 = vld [vmem:[%s1223 + $0x30] sm:$0xff]
        %v1228 = vld [vmem:[%s1223 + $0x40] sm:$0xff]
        %v1229 = vld [vmem:[%s1223 + $0x50] sm:$0xff]
        %v1230 = vld [vmem:[%s1223 + $0x60] sm:$0xff]
        %v1231 = vld [vmem:[%s1223 + $0x70] sm:$0xff]
        %v1232 = vld [vmem:[%s2 + $0x6] sm:$0x1]
        %v1233 = vlaneseq
        %v1234 = vshrl.u32 %v1233, 7
        %v1235 = vsub.s32 0, %v1234
        %v1236 = vrot.slane %v1232, %v1235
        %v1237 = vmul.f32 %v1224, %v1236
        %v1238 = vmul.f32 %v1225, %v1236
        %v1239 = vmul.f32 %v1226, %v1236
        %v1240 = vmul.f32 %v1227, %v1236
        %v1241 = vmul.f32 %v1228, %v1236
        %v1242 = vmul.f32 %v1229, %v1236
        %v1243 = vmul.f32 %v1230, %v1236
        %v1244 = vmul.f32 %v1231, %v1236
        %v1245 = vadd.f32 %v1215, %v1237
        %v1246 = vadd.f32 %v1216, %v1238
        %v1247 = vadd.f32 %v1217, %v1239
        %v1248 = vadd.f32 %v1218, %v1240
        %v1249 = vadd.f32 %v1219, %v1241
        %v1250 = vadd.f32 %v1220, %v1242
        %v1251 = vadd.f32 %v1221, %v1243
        %v1252 = vadd.f32 %v1222, %v1244
        %v1253 = vld [vmem:[%s1223 + $0x1] sm:$0xff]
        %v1254 = vld [vmem:[%s1223 + $0x11] sm:$0xff]
        %v1255 = vld [vmem:[%s1223 + $0x21] sm:$0xff]
        %v1256 = vld [vmem:[%s1223 + $0x31] sm:$0xff]
        %v1257 = vld [vmem:[%s1223 + $0x41] sm:$0xff]
        %v1258 = vld [vmem:[%s1223 + $0x51] sm:$0xff]
        %v1259 = vld [vmem:[%s1223 + $0x61] sm:$0xff]
        %v1260 = vld [vmem:[%s1223 + $0x71] sm:$0xff]
        %v1261 = vld [vmem:[%s2 + $0x7] sm:$0x1]
        %v1262 = vlaneseq
        %v1263 = vshrl.u32 %v1262, 7
        %v1264 = vsub.s32 0, %v1263
        %v1265 = vrot.slane %v1261, %v1264
        %v1266 = vmul.f32 %v1253, %v1265
        %v1267 = vmul.f32 %v1254, %v1265
        %v1268 = vmul.f32 %v1255, %v1265
        %v1269 = vmul.f32 %v1256, %v1265
        %v1270 = vmul.f32 %v1257, %v1265
        %v1271 = vmul.f32 %v1258, %v1265
        %v1272 = vmul.f32 %v1259, %v1265
        %v1273 = vmul.f32 %v1260, %v1265
        %v1274 = vadd.f32 %v1245, %v1266
        %v1275 = vadd.f32 %v1246, %v1267
        %v1276 = vadd.f32 %v1247, %v1268
        %v1277 = vadd.f32 %v1248, %v1269
        %v1278 = vadd.f32 %v1249, %v1270
        %v1279 = vadd.f32 %v1250, %v1271
        %v1280 = vadd.f32 %v1251, %v1272
        %v1281 = vadd.f32 %v1252, %v1273
        %v1282 = vld [vmem:[%s1223 + $0x2] sm:$0xff]
        %v1283 = vld [vmem:[%s1223 + $0x12] sm:$0xff]
        %v1284 = vld [vmem:[%s1223 + $0x22] sm:$0xff]
        %v1285 = vld [vmem:[%s1223 + $0x32] sm:$0xff]
        %v1286 = vld [vmem:[%s1223 + $0x42] sm:$0xff]
        %v1287 = vld [vmem:[%s1223 + $0x52] sm:$0xff]
        %v1288 = vld [vmem:[%s1223 + $0x62] sm:$0xff]
        %v1289 = vld [vmem:[%s1223 + $0x72] sm:$0xff]
        %v1290 = vld [vmem:[%s2 + $0x8] sm:$0x1]
        %v1291 = vlaneseq
        %v1292 = vshrl.u32 %v1291, 7
        %v1293 = vsub.s32 0, %v1292
        %v1294 = vrot.slane %v1290, %v1293
        %v1295 = vmul.f32 %v1282, %v1294
        %v1296 = vmul.f32 %v1283, %v1294
        %v1297 = vmul.f32 %v1284, %v1294
        %v1298 = vmul.f32 %v1285, %v1294
        %v1299 = vmul.f32 %v1286, %v1294
        %v1300 = vmul.f32 %v1287, %v1294
        %v1301 = vmul.f32 %v1288, %v1294
        %v1302 = vmul.f32 %v1289, %v1294
        %v1303 = vadd.f32 %v1274, %v1295
        %v1304 = vadd.f32 %v1275, %v1296
        %v1305 = vadd.f32 %v1276, %v1297
        %v1306 = vadd.f32 %v1277, %v1298
        %v1307 = vadd.f32 %v1278, %v1299
        %v1308 = vadd.f32 %v1279, %v1300
        %v1309 = vadd.f32 %v1280, %v1301
        %v1310 = vadd.f32 %v1281, %v1302
        %v1311 = vld [vmem:[%s4 + $0x2] sm:$0x1]
        %v1312 = vlaneseq
        %v1313 = vshrl.u32 %v1312, 7
        %v1314 = vsub.s32 0, %v1313
        %v1315 = vrot.slane %v1311, %v1314
        %v1316 = vadd.f32 %v1303, %v1315
        %v1317 = vadd.f32 %v1304, %v1315
        %v1318 = vadd.f32 %v1305, %v1315
        %v1319 = vadd.f32 %v1306, %v1315
        %v1320 = vadd.f32 %v1307, %v1315
        %v1321 = vadd.f32 %v1308, %v1315
        %v1322 = vadd.f32 %v1309, %v1315
        %v1323 = vadd.f32 %v1310, %v1315
        %v1324 = vsub.f32 0.0, %v1316
        %v1325 = vsub.f32 0.0, %v1317
        %v1326 = vsub.f32 0.0, %v1318
        %v1327 = vsub.f32 0.0, %v1319
        %v1328 = vsub.f32 0.0, %v1320
        %v1329 = vsub.f32 0.0, %v1321
        %v1330 = vsub.f32 0.0, %v1322
        %v1331 = vsub.f32 0.0, %v1323
        %v1332 = vmul.f32 %v1324, 1.442695
        %v1333 = vpow.pop %v1332
        %v1334 = vmul.f32 %v1325, 1.442695
        %v1335 = vpow.pop %v1334
        %v1336 = vmul.f32 %v1326, 1.442695
        %v1337 = vpow.pop %v1336
        %v1338 = vmul.f32 %v1327, 1.442695
        %v1339 = vpow.pop %v1338
        %v1340 = vmul.f32 %v1328, 1.442695
        %v1341 = vpow.pop %v1340
        %v1342 = vmul.f32 %v1329, 1.442695
        %v1343 = vpow.pop %v1342
        %v1344 = vmul.f32 %v1330, 1.442695
        %v1345 = vpow.pop %v1344
        %v1346 = vmul.f32 %v1331, 1.442695
        %v1347 = vpow.pop %v1346
        %v1348 = vadd.f32 %v1333, 1.0
        %v1349 = vadd.f32 %v1335, 1.0
        %v1350 = vadd.f32 %v1337, 1.0
        %v1351 = vadd.f32 %v1339, 1.0
        %v1352 = vadd.f32 %v1341, 1.0
        %v1353 = vadd.f32 %v1343, 1.0
        %v1354 = vadd.f32 %v1345, 1.0
        %v1355 = vadd.f32 %v1347, 1.0
        %v1356 = vrcp.pop %v1348
        %v1357 = vrcp.pop %v1349
        %v1358 = vrcp.pop %v1350
        %v1359 = vrcp.pop %v1351
        %v1360 = vrcp.pop %v1352
        %v1361 = vrcp.pop %v1353
        %v1362 = vrcp.pop %v1354
        %v1363 = vrcp.pop %v1355
        %v1364 = vmul.f32 %v1316, %v1356
        %v1365 = vmul.f32 %v1317, %v1357
        %v1366 = vmul.f32 %v1318, %v1358
        %v1367 = vmul.f32 %v1319, %v1359
        %v1368 = vmul.f32 %v1320, %v1360
        %v1369 = vmul.f32 %v1321, %v1361
        %v1370 = vmul.f32 %v1322, %v1362
        %v1371 = vmul.f32 %v1323, %v1363
        %v1372 = vadd.f32 %v1364, %v1365
        %v1373 = vadd.f32 %v1372, %v1366
        %v1374 = vadd.f32 %v1373, %v1367
        %v1375 = vadd.f32 %v1374, %v1368
        %v1376 = vadd.f32 %v1375, %v1369
        %v1377 = vadd.f32 %v1376, %v1370
        %v1378 = vadd.f32 %v1377, %v1371
        %v1379 = vrot.slane %v1378, 4
        %v1380 = vadd.f32 %v1378, %v1379
        %v1381 = vrot.slane %v1380, 2
        %v1382 = vadd.f32 %v1380, %v1381
        %v1383 = vrot.slane %v1382, 1
        %v1384 = vadd.f32 %v1382, %v1383
        %v1385 = vmul.f32 %v1384, 0.015625
        %v1386 = vpack.c.bf16 %v1385, %v1385
        %s1387 = scalar_lea.vmem %s3, 64
        %v1388 = vld [vmem:[%s1387] sm:$0xf]
        %v1389 = vld [vmem:[%s1387 + $0x4] sm:$0xf]
        %v1390 = vld [vmem:[%s1387 + $0x8] sm:$0xf]
        %v1391 = vld [vmem:[%s1387 + $0xc] sm:$0xf]
        %v1392 = vld [vmem:[%s1387 + $0x10] sm:$0xf]
        %v1393 = vld [vmem:[%s1387 + $0x14] sm:$0xf]
        %v1394 = vld [vmem:[%s1387 + $0x18] sm:$0xf]
        %v1395 = vld [vmem:[%s1387 + $0x1c] sm:$0xf]
        %v1396 = vld [vmem:[%s1387 + $0x20] sm:$0xf]
        %v1397 = vld [vmem:[%s1387 + $0x24] sm:$0xf]
        %v1398 = vld [vmem:[%s1387 + $0x28] sm:$0xf]
        %v1399 = vld [vmem:[%s1387 + $0x2c] sm:$0xf]
        %v1400 = vld [vmem:[%s1387 + $0x30] sm:$0xf]
        %v1401 = vld [vmem:[%s1387 + $0x34] sm:$0xf]
        %v1402 = vld [vmem:[%s1387 + $0x38] sm:$0xf]
        %v1403 = vld [vmem:[%s1387 + $0x3c] sm:$0xf]
        %v1404 = vld [vmem:[%s4 + $0x3] sm:$0x1]
        %v1421 = vunpack.c.l.b16 %v1388
        %v1422 = vunpack.c.l.b16 %v1389
        %v1423 = vunpack.c.l.b16 %v1390
        %v1424 = vunpack.c.l.b16 %v1391
        %v1425 = vunpack.c.l.b16 %v1392
        %v1426 = vunpack.c.l.b16 %v1393
        %v1427 = vunpack.c.l.b16 %v1394
        %v1428 = vunpack.c.l.b16 %v1395
        %v1429 = vunpack.c.l.b16 %v1396
        %v1430 = vunpack.c.l.b16 %v1397
        %v1431 = vunpack.c.l.b16 %v1398
        %v1432 = vunpack.c.l.b16 %v1399
        %v1433 = vunpack.c.l.b16 %v1400
        %v1434 = vunpack.c.l.b16 %v1401
        %v1435 = vunpack.c.l.b16 %v1402
        %v1436 = vunpack.c.l.b16 %v1403
        %v1437 = vpack.c.b16 %v1422, %v1421
        %v1438 = vpack.c.b16 %v1424, %v1423
        %v1439 = vpack.c.b16 %v1426, %v1425
        %v1440 = vpack.c.b16 %v1428, %v1427
        %v1441 = vpack.c.b16 %v1430, %v1429
        %v1442 = vpack.c.b16 %v1432, %v1431
        %v1443 = vpack.c.b16 %v1434, %v1433
        %v1444 = vpack.c.b16 %v1436, %v1435
        %1453 = vmatprep.subr.bf16.mxu0 0
        %1454 = vmatpush1.bf16.msra.mxu0 %v1437
        %1455 = vmatprep.subr.bf16.mxu0 0
        %1456 = vmatpush1.bf16.msra.mxu0 %v1438
        %1457 = vmatprep.subr.bf16.mxu0 0
        %1458 = vmatpush1.bf16.msra.mxu0 %v1439
        %1459 = vmatprep.subr.bf16.mxu0 0
        %1460 = vmatpush1.bf16.msra.mxu0 %v1440
        %1461 = vmatprep.subr.bf16.mxu0 0
        %1462 = vmatpush1.bf16.msra.mxu0 %v1441
        %1463 = vmatprep.subr.bf16.mxu0 0
        %1464 = vmatpush1.bf16.msra.mxu0 %v1442
        %1465 = vmatprep.subr.bf16.mxu0 0
        %1466 = vmatpush1.bf16.msra.mxu0 %v1443
        %1467 = vmatprep.subr.bf16.mxu0 0
        %1468 = vmatpush1.bf16.msra.mxu0 %v1444
        %1469 = vmatprep.subr.bf16.mxu0 0
        %1470 = vmatpush1.bf16.msra.mxu0 0
        %1471 = vmatprep.subr.bf16.mxu0 0
        %1472 = vmatpush1.bf16.msra.mxu0 0
        %1473 = vmatprep.subr.bf16.mxu0 0
        %1474 = vmatpush1.bf16.msra.mxu0 0
        %1475 = vmatprep.subr.bf16.mxu0 0
        %1476 = vmatpush1.bf16.msra.mxu0 0
        %1477 = vmatprep.subr.bf16.mxu0 0
        %1478 = vmatpush1.bf16.msra.mxu0 0
        %1479 = vmatprep.subr.bf16.mxu0 0
        %1480 = vmatpush1.bf16.msra.mxu0 0
        %1481 = vmatprep.subr.bf16.mxu0 0
        %1482 = vmatpush1.bf16.msra.mxu0 0
        %1483 = vmatprep.subr.bf16.mxu0 0
        %1484 = vmatpush1.bf16.msra.mxu0 0
        %1485 = vmatprep.mubr.bf16.mxu0 0
        %1486 = vmatmul.mubr.bf16.gmra.mrb[0].mxu0 %v1386
        %v1487 = vpop.f32.mrb[0].mxu0
        %v1488 = vadd.f32 %v1404, %v1487
        %v1489 = vpop.f32.mrb[0].mxu0
        %v1490 = vpop.f32.mrb[0].mxu0
        %v1491 = vpop.f32.mrb[0].mxu0
        %1492 = vdwg.mxu0
        %v1493 = vsub.f32 0.0, %v1488
        %v1494 = vmul.f32 %v1493, 1.442695
        %v1495 = vpow.pop %v1494
        %v1496 = vadd.f32 %v1495, 1.0
        %v1497 = vrcp.pop %v1496
        %v1498 = vmul.f32 %v1488, %v1497
        %v1499 = vpack.c.bf16 %v1498, %v1498
        %s1500 = scalar_lea.vmem %s3, 128
        %v1501 = vld [vmem:[%s1500] sm:$0xf]
        %v1502 = vld [vmem:[%s1500 + $0x4] sm:$0xf]
        %v1503 = vld [vmem:[%s1500 + $0x8] sm:$0xf]
        %v1504 = vld [vmem:[%s1500 + $0xc] sm:$0xf]
        %v1505 = vld [vmem:[%s1500 + $0x10] sm:$0xf]
        %v1506 = vld [vmem:[%s1500 + $0x14] sm:$0xf]
        %v1507 = vld [vmem:[%s1500 + $0x18] sm:$0xf]
        %v1508 = vld [vmem:[%s1500 + $0x1c] sm:$0xf]
        %v1509 = vld [vmem:[%s1500 + $0x20] sm:$0xf]
        %v1510 = vld [vmem:[%s1500 + $0x24] sm:$0xf]
        %v1511 = vld [vmem:[%s1500 + $0x28] sm:$0xf]
        %v1512 = vld [vmem:[%s1500 + $0x2c] sm:$0xf]
        %v1513 = vld [vmem:[%s1500 + $0x30] sm:$0xf]
        %v1514 = vld [vmem:[%s1500 + $0x34] sm:$0xf]
        %v1515 = vld [vmem:[%s1500 + $0x38] sm:$0xf]
        %v1516 = vld [vmem:[%s1500 + $0x3c] sm:$0xf]
        %v1517 = vld [vmem:[%s4 + $0x4] sm:$0x1]
        %v1534 = vunpack.c.l.b16 %v1501
        %v1535 = vunpack.c.l.b16 %v1502
        %v1536 = vunpack.c.l.b16 %v1503
        %v1537 = vunpack.c.l.b16 %v1504
        %v1538 = vunpack.c.l.b16 %v1505
        %v1539 = vunpack.c.l.b16 %v1506
        %v1540 = vunpack.c.l.b16 %v1507
        %v1541 = vunpack.c.l.b16 %v1508
        %v1542 = vunpack.c.l.b16 %v1509
        %v1543 = vunpack.c.l.b16 %v1510
        %v1544 = vunpack.c.l.b16 %v1511
        %v1545 = vunpack.c.l.b16 %v1512
        %v1546 = vunpack.c.l.b16 %v1513
        %v1547 = vunpack.c.l.b16 %v1514
        %v1548 = vunpack.c.l.b16 %v1515
        %v1549 = vunpack.c.l.b16 %v1516
        %v1550 = vpack.c.b16 %v1535, %v1534
        %v1551 = vpack.c.b16 %v1537, %v1536
        %v1552 = vpack.c.b16 %v1539, %v1538
        %v1553 = vpack.c.b16 %v1541, %v1540
        %v1554 = vpack.c.b16 %v1543, %v1542
        %v1555 = vpack.c.b16 %v1545, %v1544
        %v1556 = vpack.c.b16 %v1547, %v1546
        %v1557 = vpack.c.b16 %v1549, %v1548
        %1566 = vmatprep.subr.bf16.mxu0 0
        %1567 = vmatpush1.bf16.msra.mxu0 %v1550
        %1568 = vmatprep.subr.bf16.mxu0 0
        %1569 = vmatpush1.bf16.msra.mxu0 %v1551
        %1570 = vmatprep.subr.bf16.mxu0 0
        %1571 = vmatpush1.bf16.msra.mxu0 %v1552
        %1572 = vmatprep.subr.bf16.mxu0 0
        %1573 = vmatpush1.bf16.msra.mxu0 %v1553
        %1574 = vmatprep.subr.bf16.mxu0 0
        %1575 = vmatpush1.bf16.msra.mxu0 %v1554
        %1576 = vmatprep.subr.bf16.mxu0 0
        %1577 = vmatpush1.bf16.msra.mxu0 %v1555
        %1578 = vmatprep.subr.bf16.mxu0 0
        %1579 = vmatpush1.bf16.msra.mxu0 %v1556
        %1580 = vmatprep.subr.bf16.mxu0 0
        %1581 = vmatpush1.bf16.msra.mxu0 %v1557
        %1582 = vmatprep.subr.bf16.mxu0 0
        %1583 = vmatpush1.bf16.msra.mxu0 0
        %1584 = vmatprep.subr.bf16.mxu0 0
        %1585 = vmatpush1.bf16.msra.mxu0 0
        %1586 = vmatprep.subr.bf16.mxu0 0
        %1587 = vmatpush1.bf16.msra.mxu0 0
        %1588 = vmatprep.subr.bf16.mxu0 0
        %1589 = vmatpush1.bf16.msra.mxu0 0
        %1590 = vmatprep.subr.bf16.mxu0 0
        %1591 = vmatpush1.bf16.msra.mxu0 0
        %1592 = vmatprep.subr.bf16.mxu0 0
        %1593 = vmatpush1.bf16.msra.mxu0 0
        %1594 = vmatprep.subr.bf16.mxu0 0
        %1595 = vmatpush1.bf16.msra.mxu0 0
        %1596 = vmatprep.subr.bf16.mxu0 0
        %1597 = vmatpush1.bf16.msra.mxu0 0
        %1598 = vmatprep.mubr.bf16.mxu0 0
        %1599 = vmatmul.mubr.bf16.gmra.mrb[0].mxu0 %v1499
        %v1600 = vpop.f32.mrb[0].mxu0
        %v1601 = vadd.f32 %v1517, %v1600
        %v1602 = vpop.f32.mrb[0].mxu0
        %v1603 = vpop.f32.mrb[0].mxu0
        %v1604 = vpop.f32.mrb[0].mxu0
        %1605 = vdwg.mxu0
        %v1606 = vsub.f32 0.0, %v1601
        %v1607 = vmul.f32 %v1606, 1.442695
        %v1608 = vpow.pop %v1607
        %v1609 = vadd.f32 %v1608, 1.0
        %v1610 = vrcp.pop %v1609
        %v1611 = vlaneseq
        %v1612 = vshrl.u32 %v1611, 7
        %v1613 = vsub.s32 0, %v1612
        %v1614 = vrot.slane %v1610, %v1613
        %v1615 = vmul.f32 %v1364, %v1614
        %v1616 = vmul.f32 %v1365, %v1614
        %v1617 = vmul.f32 %v1366, %v1614
        %v1618 = vmul.f32 %v1367, %v1614
        %v1619 = vmul.f32 %v1368, %v1614
        %v1620 = vmul.f32 %v1369, %v1614
        %v1621 = vmul.f32 %v1370, %v1614
        %v1622 = vmul.f32 %v1371, %v1614
        %v1623 = vpack.c.bf16 %v1616, %v1615
        %v1624 = vpack.c.bf16 %v1618, %v1617
        %v1625 = vpack.c.bf16 %v1620, %v1619
        %v1626 = vpack.c.bf16 %v1622, %v1621
        %s1627 = scalar_lea.vmem %s3, 192
        %v1628 = vld [vmem:[%s1627] sm:$0xf]
        %v1629 = vld [vmem:[%s1627 + $0x4] sm:$0xf]
        %v1630 = vld [vmem:[%s1627 + $0x8] sm:$0xf]
        %v1631 = vld [vmem:[%s1627 + $0xc] sm:$0xf]
        %v1632 = vld [vmem:[%s1627 + $0x10] sm:$0xf]
        %v1633 = vld [vmem:[%s1627 + $0x14] sm:$0xf]
        %v1634 = vld [vmem:[%s1627 + $0x18] sm:$0xf]
        %v1635 = vld [vmem:[%s1627 + $0x1c] sm:$0xf]
        %v1636 = vld [vmem:[%s1627 + $0x20] sm:$0xf]
        %v1637 = vld [vmem:[%s1627 + $0x24] sm:$0xf]
        %v1638 = vld [vmem:[%s1627 + $0x28] sm:$0xf]
        %v1639 = vld [vmem:[%s1627 + $0x2c] sm:$0xf]
        %v1640 = vld [vmem:[%s1627 + $0x30] sm:$0xf]
        %v1641 = vld [vmem:[%s1627 + $0x34] sm:$0xf]
        %v1642 = vld [vmem:[%s1627 + $0x38] sm:$0xf]
        %v1643 = vld [vmem:[%s1627 + $0x3c] sm:$0xf]
        %v1644 = vld [vmem:[%s4 + $0x5] sm:$0x1]
        %v1645 = vlaneseq
        %v1646 = vshrl.u32 %v1645, 7
        %v1647 = vsub.s32 0, %v1646
        %v1648 = vrot.slane %v1644, %v1647
        %v1665 = vunpack.c.l.b16 %v1628
        %v1666 = vunpack.c.l.b16 %v1629
        %v1667 = vunpack.c.l.b16 %v1630
        %v1668 = vunpack.c.l.b16 %v1631
        %v1669 = vunpack.c.l.b16 %v1632
        %v1670 = vunpack.c.l.b16 %v1633
        %v1671 = vunpack.c.l.b16 %v1634
        %v1672 = vunpack.c.l.b16 %v1635
        %v1673 = vunpack.c.l.b16 %v1636
        %v1674 = vunpack.c.l.b16 %v1637
        %v1675 = vunpack.c.l.b16 %v1638
        %v1676 = vunpack.c.l.b16 %v1639
        %v1677 = vunpack.c.l.b16 %v1640
        %v1678 = vunpack.c.l.b16 %v1641
        %v1679 = vunpack.c.l.b16 %v1642
        %v1680 = vunpack.c.l.b16 %v1643
        %v1681 = vpack.c.b16 %v1666, %v1665
        %v1682 = vpack.c.b16 %v1668, %v1667
        %v1683 = vpack.c.b16 %v1670, %v1669
        %v1684 = vpack.c.b16 %v1672, %v1671
        %v1685 = vpack.c.b16 %v1674, %v1673
        %v1686 = vpack.c.b16 %v1676, %v1675
        %v1687 = vpack.c.b16 %v1678, %v1677
        %v1688 = vpack.c.b16 %v1680, %v1679
        %1697 = vmatprep.subr.bf16.mxu0 0
        %1698 = vmatpush1.bf16.msra.mxu0 %v1681
        %1699 = vmatprep.subr.bf16.mxu0 0
        %1700 = vmatpush1.bf16.msra.mxu0 %v1682
        %1701 = vmatprep.subr.bf16.mxu0 0
        %1702 = vmatpush1.bf16.msra.mxu0 %v1683
        %1703 = vmatprep.subr.bf16.mxu0 0
        %1704 = vmatpush1.bf16.msra.mxu0 %v1684
        %1705 = vmatprep.subr.bf16.mxu0 0
        %1706 = vmatpush1.bf16.msra.mxu0 %v1685
        %1707 = vmatprep.subr.bf16.mxu0 0
        %1708 = vmatpush1.bf16.msra.mxu0 %v1686
        %1709 = vmatprep.subr.bf16.mxu0 0
        %1710 = vmatpush1.bf16.msra.mxu0 %v1687
        %1711 = vmatprep.subr.bf16.mxu0 0
        %1712 = vmatpush1.bf16.msra.mxu0 %v1688
        %1713 = vmatprep.subr.bf16.mxu0 0
        %1714 = vmatpush1.bf16.msra.mxu0 0
        %1715 = vmatprep.subr.bf16.mxu0 0
        %1716 = vmatpush1.bf16.msra.mxu0 0
        %1717 = vmatprep.subr.bf16.mxu0 0
        %1718 = vmatpush1.bf16.msra.mxu0 0
        %1719 = vmatprep.subr.bf16.mxu0 0
        %1720 = vmatpush1.bf16.msra.mxu0 0
        %1721 = vmatprep.subr.bf16.mxu0 0
        %1722 = vmatpush1.bf16.msra.mxu0 0
        %1723 = vmatprep.subr.bf16.mxu0 0
        %1724 = vmatpush1.bf16.msra.mxu0 0
        %1725 = vmatprep.subr.bf16.mxu0 0
        %1726 = vmatpush1.bf16.msra.mxu0 0
        %1727 = vmatprep.subr.bf16.mxu0 0
        %1728 = vmatpush1.bf16.msra.mxu0 0
        %1729 = vmatprep.mubr.bf16.mxu0 0
        %1730 = vmatmul.mubr.bf16.gmra.mrb[0].mxu0 %v1623
        %v1731 = vpop.f32.mrb[0].mxu0
        %v1732 = vadd.f32 %v1648, %v1731
        %v1733 = vpop.f32.mrb[0].mxu0
        %v1734 = vpop.f32.mrb[0].mxu0
        %v1735 = vadd.f32 %v1648, %v1734
        %v1736 = vpop.f32.mrb[0].mxu0
        %1737 = vmatprep.mubr.bf16.mxu0 0
        %1738 = vmatmul.mubr.bf16.gmra.mrb[0].mxu0 %v1624
        %v1739 = vpop.f32.mrb[0].mxu0
        %v1740 = vadd.f32 %v1648, %v1739
        %v1741 = vpop.f32.mrb[0].mxu0
        %v1742 = vpop.f32.mrb[0].mxu0
        %v1743 = vadd.f32 %v1648, %v1742
        %v1744 = vpop.f32.mrb[0].mxu0
        %1745 = vmatprep.mubr.bf16.mxu0 0
        %1746 = vmatmul.mubr.bf16.gmra.mrb[0].mxu0 %v1625
        %v1747 = vpop.f32.mrb[0].mxu0
        %v1748 = vadd.f32 %v1648, %v1747
        %v1749 = vpop.f32.mrb[0].mxu0
        %v1750 = vpop.f32.mrb[0].mxu0
        %v1751 = vadd.f32 %v1648, %v1750
        %v1752 = vpop.f32.mrb[0].mxu0
        %1753 = vmatprep.mubr.bf16.mxu0 0
        %1754 = vmatmul.mubr.bf16.gmra.mrb[0].mxu0 %v1626
        %v1755 = vpop.f32.mrb[0].mxu0
        %v1756 = vadd.f32 %v1648, %v1755
        %v1757 = vpop.f32.mrb[0].mxu0
        %v1758 = vpop.f32.mrb[0].mxu0
        %v1759 = vadd.f32 %v1648, %v1758
        %v1760 = vpop.f32.mrb[0].mxu0
        %1761 = vdwg.mxu0
        %v1762 = vpack.c.bf16 %v1735, %v1732
        %v1763 = vpack.c.bf16 %v1743, %v1740
        %v1764 = vpack.c.bf16 %v1751, %v1748
        %v1765 = vpack.c.bf16 %v1759, %v1756
        %s1766 = scalar_lea.vmem %s3, 256
        %v1767 = vld [vmem:[%s1766] sm:$0xf]
        %v1768 = vld [vmem:[%s1766 + $0x4] sm:$0xf]
        %v1769 = vld [vmem:[%s1766 + $0x8] sm:$0xf]
        %v1770 = vld [vmem:[%s1766 + $0xc] sm:$0xf]
        %v1771 = vld [vmem:[%s1766 + $0x10] sm:$0xf]
        %v1772 = vld [vmem:[%s1766 + $0x14] sm:$0xf]
        %v1773 = vld [vmem:[%s1766 + $0x18] sm:$0xf]
        %v1774 = vld [vmem:[%s1766 + $0x1c] sm:$0xf]
        %v1775 = vld [vmem:[%s1766 + $0x20] sm:$0xf]
        %v1776 = vld [vmem:[%s1766 + $0x24] sm:$0xf]
        %v1777 = vld [vmem:[%s1766 + $0x28] sm:$0xf]
        %v1778 = vld [vmem:[%s1766 + $0x2c] sm:$0xf]
        %v1779 = vld [vmem:[%s1766 + $0x30] sm:$0xf]
        %v1780 = vld [vmem:[%s1766 + $0x34] sm:$0xf]
        %v1781 = vld [vmem:[%s1766 + $0x38] sm:$0xf]
        %v1782 = vld [vmem:[%s1766 + $0x3c] sm:$0xf]
        %v1783 = vld [vmem:[%s4 + $0x6] sm:$0x1]
        %v1784 = vlaneseq
        %v1785 = vshrl.u32 %v1784, 7
        %v1786 = vsub.s32 0, %v1785
        %v1787 = vrot.slane %v1783, %v1786
        %v1804 = vunpack.c.l.b16 %v1767
        %v1805 = vunpack.c.l.b16 %v1768
        %v1806 = vunpack.c.l.b16 %v1769
        %v1807 = vunpack.c.l.b16 %v1770
        %v1808 = vunpack.c.l.b16 %v1771
        %v1809 = vunpack.c.l.b16 %v1772
        %v1810 = vunpack.c.l.b16 %v1773
        %v1811 = vunpack.c.l.b16 %v1774
        %v1812 = vunpack.c.l.b16 %v1775
        %v1813 = vunpack.c.l.b16 %v1776
        %v1814 = vunpack.c.l.b16 %v1777
        %v1815 = vunpack.c.l.b16 %v1778
        %v1816 = vunpack.c.l.b16 %v1779
        %v1817 = vunpack.c.l.b16 %v1780
        %v1818 = vunpack.c.l.b16 %v1781
        %v1819 = vunpack.c.l.b16 %v1782
        %v1820 = vpack.c.b16 %v1805, %v1804
        %v1821 = vpack.c.b16 %v1807, %v1806
        %v1822 = vpack.c.b16 %v1809, %v1808
        %v1823 = vpack.c.b16 %v1811, %v1810
        %v1824 = vpack.c.b16 %v1813, %v1812
        %v1825 = vpack.c.b16 %v1815, %v1814
        %v1826 = vpack.c.b16 %v1817, %v1816
        %v1827 = vpack.c.b16 %v1819, %v1818
        %1836 = vmatprep.subr.bf16.mxu0 0
        %1837 = vmatpush1.bf16.msra.mxu0 %v1820
        %1838 = vmatprep.subr.bf16.mxu0 0
        %1839 = vmatpush1.bf16.msra.mxu0 %v1821
        %1840 = vmatprep.subr.bf16.mxu0 0
        %1841 = vmatpush1.bf16.msra.mxu0 %v1822
        %1842 = vmatprep.subr.bf16.mxu0 0
        %1843 = vmatpush1.bf16.msra.mxu0 %v1823
        %1844 = vmatprep.subr.bf16.mxu0 0
        %1845 = vmatpush1.bf16.msra.mxu0 %v1824
        %1846 = vmatprep.subr.bf16.mxu0 0
        %1847 = vmatpush1.bf16.msra.mxu0 %v1825
        %1848 = vmatprep.subr.bf16.mxu0 0
        %1849 = vmatpush1.bf16.msra.mxu0 %v1826
        %1850 = vmatprep.subr.bf16.mxu0 0
        %1851 = vmatpush1.bf16.msra.mxu0 %v1827
        %1852 = vmatprep.subr.bf16.mxu0 0
        %1853 = vmatpush1.bf16.msra.mxu0 0
        %1854 = vmatprep.subr.bf16.mxu0 0
        %1855 = vmatpush1.bf16.msra.mxu0 0
        %1856 = vmatprep.subr.bf16.mxu0 0
        %1857 = vmatpush1.bf16.msra.mxu0 0
        %1858 = vmatprep.subr.bf16.mxu0 0
        %1859 = vmatpush1.bf16.msra.mxu0 0
        %1860 = vmatprep.subr.bf16.mxu0 0
        %1861 = vmatpush1.bf16.msra.mxu0 0
        %1862 = vmatprep.subr.bf16.mxu0 0
        %1863 = vmatpush1.bf16.msra.mxu0 0
        %1864 = vmatprep.subr.bf16.mxu0 0
        %1865 = vmatpush1.bf16.msra.mxu0 0
        %1866 = vmatprep.subr.bf16.mxu0 0
        %1867 = vmatpush1.bf16.msra.mxu0 0
        %1868 = vmatprep.mubr.bf16.mxu0 0
        %1869 = vmatmul.mubr.bf16.gmra.mrb[0].mxu0 %v1762
        %v1870 = vpop.f32.mrb[0].mxu0
        %v1871 = vadd.f32 %v1787, %v1870
        %v1872 = vpop.f32.mrb[0].mxu0
        %v1873 = vpop.f32.mrb[0].mxu0
        %v1874 = vadd.f32 %v1787, %v1873
        %v1875 = vpop.f32.mrb[0].mxu0
        %1876 = vmatprep.mubr.bf16.mxu0 0
        %1877 = vmatmul.mubr.bf16.gmra.mrb[0].mxu0 %v1763
        %v1878 = vpop.f32.mrb[0].mxu0
        %v1879 = vadd.f32 %v1787, %v1878
        %v1880 = vpop.f32.mrb[0].mxu0
        %v1881 = vpop.f32.mrb[0].mxu0
        %v1882 = vadd.f32 %v1787, %v1881
        %v1883 = vpop.f32.mrb[0].mxu0
        %1884 = vmatprep.mubr.bf16.mxu0 0
        %1885 = vmatmul.mubr.bf16.gmra.mrb[0].mxu0 %v1764
        %v1886 = vpop.f32.mrb[0].mxu0
        %v1887 = vadd.f32 %v1787, %v1886
        %v1888 = vpop.f32.mrb[0].mxu0
        %v1889 = vpop.f32.mrb[0].mxu0
        %v1890 = vadd.f32 %v1787, %v1889
        %v1891 = vpop.f32.mrb[0].mxu0
        %1892 = vmatprep.mubr.bf16.mxu0 0
        %1893 = vmatmul.mubr.bf16.gmra.mrb[0].mxu0 %v1765
        %v1894 = vpop.f32.mrb[0].mxu0
        %v1895 = vadd.f32 %v1787, %v1894
        %v1896 = vpop.f32.mrb[0].mxu0
        %v1897 = vpop.f32.mrb[0].mxu0
        %v1898 = vadd.f32 %v1787, %v1897
        %v1899 = vpop.f32.mrb[0].mxu0
        %1900 = vdwg.mxu0
        %v1901 = vsub.f32 0.0, %v1871
        %v1902 = vsub.f32 0.0, %v1874
        %v1903 = vsub.f32 0.0, %v1879
        %v1904 = vsub.f32 0.0, %v1882
        %v1905 = vsub.f32 0.0, %v1887
        %v1906 = vsub.f32 0.0, %v1890
        %v1907 = vsub.f32 0.0, %v1895
        %v1908 = vsub.f32 0.0, %v1898
        %v1909 = vmul.f32 %v1901, 1.442695
        %v1910 = vpow.pop %v1909
        %v1911 = vmul.f32 %v1902, 1.442695
        %v1912 = vpow.pop %v1911
        %v1913 = vmul.f32 %v1903, 1.442695
        %v1914 = vpow.pop %v1913
        %v1915 = vmul.f32 %v1904, 1.442695
        %v1916 = vpow.pop %v1915
        %v1917 = vmul.f32 %v1905, 1.442695
        %v1918 = vpow.pop %v1917
        %v1919 = vmul.f32 %v1906, 1.442695
        %v1920 = vpow.pop %v1919
        %v1921 = vmul.f32 %v1907, 1.442695
        %v1922 = vpow.pop %v1921
        %v1923 = vmul.f32 %v1908, 1.442695
        %v1924 = vpow.pop %v1923
        %v1925 = vadd.f32 %v1910, 1.0
        %v1926 = vadd.f32 %v1912, 1.0
        %v1927 = vadd.f32 %v1914, 1.0
        %v1928 = vadd.f32 %v1916, 1.0
        %v1929 = vadd.f32 %v1918, 1.0
        %v1930 = vadd.f32 %v1920, 1.0
        %v1931 = vadd.f32 %v1922, 1.0
        %v1932 = vadd.f32 %v1924, 1.0
        %v1933 = vrcp.pop %v1925
        %v1934 = vrcp.pop %v1926
        %v1935 = vrcp.pop %v1927
        %v1936 = vrcp.pop %v1928
        %v1937 = vrcp.pop %v1929
        %v1938 = vrcp.pop %v1930
        %v1939 = vrcp.pop %v1931
        %v1940 = vrcp.pop %v1932
        %v1941 = vmul.f32 %v1871, %v1933
        %v1942 = vmul.f32 %v1874, %v1934
        %v1943 = vmul.f32 %v1879, %v1935
        %v1944 = vmul.f32 %v1882, %v1936
        %v1945 = vmul.f32 %v1887, %v1937
        %v1946 = vmul.f32 %v1890, %v1938
        %v1947 = vmul.f32 %v1895, %v1939
        %v1948 = vmul.f32 %v1898, %v1940
        %v1949 = vadd.f32 %v1941, %v1942
        %v1950 = vadd.f32 %v1949, %v1943
        %v1951 = vadd.f32 %v1950, %v1944
        %v1952 = vadd.f32 %v1951, %v1945
        %v1953 = vadd.f32 %v1952, %v1946
        %v1954 = vadd.f32 %v1953, %v1947
        %v1955 = vadd.f32 %v1954, %v1948
        %v1956 = vrot.slane %v1955, 4
        %v1957 = vadd.f32 %v1955, %v1956
        %v1958 = vrot.slane %v1957, 2
        %v1959 = vadd.f32 %v1957, %v1958
        %v1960 = vrot.slane %v1959, 1
        %v1961 = vadd.f32 %v1959, %v1960
        %v1962 = vmul.f32 %v1961, 0.015625
        %v1963 = vpack.c.bf16 %v1962, %v1962
        %s1964 = scalar_lea.vmem %s3, 320
        %v1965 = vld [vmem:[%s1964] sm:$0xf]
        %v1966 = vld [vmem:[%s1964 + $0x4] sm:$0xf]
        %v1967 = vld [vmem:[%s1964 + $0x8] sm:$0xf]
        %v1968 = vld [vmem:[%s1964 + $0xc] sm:$0xf]
        %v1969 = vld [vmem:[%s1964 + $0x10] sm:$0xf]
        %v1970 = vld [vmem:[%s1964 + $0x14] sm:$0xf]
        %v1971 = vld [vmem:[%s1964 + $0x18] sm:$0xf]
        %v1972 = vld [vmem:[%s1964 + $0x1c] sm:$0xf]
        %v1973 = vld [vmem:[%s1964 + $0x20] sm:$0xf]
        %v1974 = vld [vmem:[%s1964 + $0x24] sm:$0xf]
        %v1975 = vld [vmem:[%s1964 + $0x28] sm:$0xf]
        %v1976 = vld [vmem:[%s1964 + $0x2c] sm:$0xf]
        %v1977 = vld [vmem:[%s1964 + $0x30] sm:$0xf]
        %v1978 = vld [vmem:[%s1964 + $0x34] sm:$0xf]
        %v1979 = vld [vmem:[%s1964 + $0x38] sm:$0xf]
        %v1980 = vld [vmem:[%s1964 + $0x3c] sm:$0xf]
        %v1981 = vld [vmem:[%s4 + $0x7] sm:$0x1]
        %v1998 = vunpack.c.l.b16 %v1965
        %v1999 = vunpack.c.l.b16 %v1966
        %v2000 = vunpack.c.l.b16 %v1967
        %v2001 = vunpack.c.l.b16 %v1968
        %v2002 = vunpack.c.l.b16 %v1969
        %v2003 = vunpack.c.l.b16 %v1970
        %v2004 = vunpack.c.l.b16 %v1971
        %v2005 = vunpack.c.l.b16 %v1972
        %v2006 = vunpack.c.l.b16 %v1973
        %v2007 = vunpack.c.l.b16 %v1974
        %v2008 = vunpack.c.l.b16 %v1975
        %v2009 = vunpack.c.l.b16 %v1976
        %v2010 = vunpack.c.l.b16 %v1977
        %v2011 = vunpack.c.l.b16 %v1978
        %v2012 = vunpack.c.l.b16 %v1979
        %v2013 = vunpack.c.l.b16 %v1980
        %v2014 = vpack.c.b16 %v1999, %v1998
        %v2015 = vpack.c.b16 %v2001, %v2000
        %v2016 = vpack.c.b16 %v2003, %v2002
        %v2017 = vpack.c.b16 %v2005, %v2004
        %v2018 = vpack.c.b16 %v2007, %v2006
        %v2019 = vpack.c.b16 %v2009, %v2008
        %v2020 = vpack.c.b16 %v2011, %v2010
        %v2021 = vpack.c.b16 %v2013, %v2012
        %2030 = vmatprep.subr.bf16.mxu0 0
        %2031 = vmatpush1.bf16.msra.mxu0 %v2014
        %2032 = vmatprep.subr.bf16.mxu0 0
        %2033 = vmatpush1.bf16.msra.mxu0 %v2015
        %2034 = vmatprep.subr.bf16.mxu0 0
        %2035 = vmatpush1.bf16.msra.mxu0 %v2016
        %2036 = vmatprep.subr.bf16.mxu0 0
        %2037 = vmatpush1.bf16.msra.mxu0 %v2017
        %2038 = vmatprep.subr.bf16.mxu0 0
        %2039 = vmatpush1.bf16.msra.mxu0 %v2018
        %2040 = vmatprep.subr.bf16.mxu0 0
        %2041 = vmatpush1.bf16.msra.mxu0 %v2019
        %2042 = vmatprep.subr.bf16.mxu0 0
        %2043 = vmatpush1.bf16.msra.mxu0 %v2020
        %2044 = vmatprep.subr.bf16.mxu0 0
        %2045 = vmatpush1.bf16.msra.mxu0 %v2021
        %2046 = vmatprep.subr.bf16.mxu0 0
        %2047 = vmatpush1.bf16.msra.mxu0 0
        %2048 = vmatprep.subr.bf16.mxu0 0
        %2049 = vmatpush1.bf16.msra.mxu0 0
        %2050 = vmatprep.subr.bf16.mxu0 0
        %2051 = vmatpush1.bf16.msra.mxu0 0
        %2052 = vmatprep.subr.bf16.mxu0 0
        %2053 = vmatpush1.bf16.msra.mxu0 0
        %2054 = vmatprep.subr.bf16.mxu0 0
        %2055 = vmatpush1.bf16.msra.mxu0 0
        %2056 = vmatprep.subr.bf16.mxu0 0
        %2057 = vmatpush1.bf16.msra.mxu0 0
        %2058 = vmatprep.subr.bf16.mxu0 0
        %2059 = vmatpush1.bf16.msra.mxu0 0
        %2060 = vmatprep.subr.bf16.mxu0 0
        %2061 = vmatpush1.bf16.msra.mxu0 0
        %2062 = vmatprep.mubr.bf16.mxu0 0
        %2063 = vmatmul.mubr.bf16.gmra.mrb[0].mxu0 %v1963
        %v2064 = vpop.f32.mrb[0].mxu0
        %v2065 = vadd.f32 %v1981, %v2064
        %v2066 = vpop.f32.mrb[0].mxu0
        %v2067 = vpop.f32.mrb[0].mxu0
        %v2068 = vpop.f32.mrb[0].mxu0
        %2069 = vdwg.mxu0
        %2070 = vst [vmem:[%s216] sm:$0x1] %v2065
        %s2071 = sand.u32 %s137, 1
        %s2072 = scalar_lea.sflag [#allocation4], %s2071
        %s2073 = sand.u32 %s137, 1
        %s2074 = scalar_lea.vmem [#allocation3], %s2073
        // Predicated region
        $region41: #{_lambda_.1} parent=39 // pred_check
          %p2075 = pneg %p147
        $region42: #{_lambda_.1} parent=39 // pred_check_branch
          %2077 = sbr.rel (%p2075) target = $region44
        $region43: #{_lambda_.1} parent=39 // pred_region
          %s2079 = ssub.s32 16, 16
          %2080 = vsyncadd %s2072, %s2079
          %s2081 = smul.addr %s19, 16
          %s2082 = scalar_lea.hbm %s5, %s2081
          %s2084 = sshll.u32 %s2074, 4
          %s2085 = int_to_ptr.vmem [resolvable:$true] %s2084
          %2087 = dma.vmem_to_hbm [thread:$0]  %s2085, 16, %s2082, %s2072
        $region44: #{_lambda_.1} parent=39 // pred_fallthru
          _
      $region40: #{_lambda_.1} parent=5 // pred_fallthru
        _
      %p2088 = scmp.le.s32.totalorder 2, %s14
      // Predicated region
      $region45: #{_lambda_.1} parent=5 // pred_check
        %p2089 = pneg %p2088
      $region46: #{_lambda_.1} parent=5 // pred_check_branch
        %2091 = sbr.rel (%p2089) target = $region48
      $region47: #{_lambda_.1} parent=5 // pred_region
        %s2092 = ssub.s32 %s14, 2
        // Predicated region
        $region49: #{_lambda_.1} parent=47 // pred_check
          %p2093 = pneg %p153
        $region50: #{_lambda_.1} parent=47 // pred_check_branch
          %2095 = sbr.rel (%p2093) target = $region52
        $region51: #{_lambda_.1} parent=47 // pred_region
          %s2096 = sand.u32 %s138, 1
          %s2097 = scalar_lea.sflag [#allocation4], %s2096
          %s2098 = sand.u32 %s138, 1
          %s2099 = scalar_lea.vmem [#allocation3], %s2098
          %2100 = dma.done %s2097, 16
        $region52: #{_lambda_.1} parent=47 // pred_fallthru
          _
      $region48: #{_lambda_.1} parent=5 // pred_fallthru
        _
    $region6: #{_lambda_.1} parent=1 // loop_footer
      %s18 = sadd.s32 1, %s14
    $region7: #{_lambda_.1} parent=1 // loop_footer_branch
      %13 = sbr.rel target = $region3
    $region8: #{_lambda_.1} parent=1 // loop_exit
      _
    %2101 = vsyncpa [#allocation4], 1
    %s2102 = scalar_lea.sflag [#allocation4], 1
    %2103 = vsyncpa %s2102, 1

</llo_original>
